<compile_context>
chip_gen: v7x
topology: tpu7x:2x2x1
jax: 0.10.0
libtpu: 0.0.40
codegen_flags: <defaults>
</compile_context>

<pallas_src>
import functools
import math

import jax
import jax.numpy as jnp
from jax.experimental import pallas as pl
from jax.experimental.pallas import tpu as pltpu


def _layer_norm(x, w, b, eps=1e-5):
    mu = jnp.mean(x, axis=-1, keepdims=True)
    var = jnp.mean((x - mu) ** 2, axis=-1, keepdims=True)
    return (x - mu) * jax.lax.rsqrt(var + eps) * w + b


def encoder_stack_kernel(src_ref, posmod_ref,
                         wqk_ref, bqk_ref, wv_ref, wo_ref,
                         w1_ref, b1_ref, w2_ref, vecs_ref,
                         out_ref, attn_ref,
                         x_scr, *, num_heads):
    """Grid = (B, L): one batch element x one encoder layer per step.

    The (S, D) activation is carried across the layer axis in VMEM scratch.
    Weights are (K, N) oriented, per-layer indexed, with the attention scale
    pre-folded into the Q projection."""
    l = pl.program_id(1)
    num_l = pl.num_programs(1)

    # First layer of each batch element: load the input activation.
    @pl.when(l == 0)
    def _():
        x_scr[...] = src_ref[0]

    x = x_scr[...]                                  # (S, D) f32
    S, D = x.shape
    H = num_heads
    Dh = D // H
    bf16 = jnp.bfloat16

    vecs = vecs_ref[0]                              # (7, D) f32 packed vectors
    ln1_w, ln1_b = vecs[0:1], vecs[1:2]
    ln2_w, ln2_b = vecs[2:3], vecs[3:4]
    bo, b2, bv = vecs[4:5], vecs[5:6], vecs[6:7]

    # ---- fused projections (full MXU width, LHS pushed once) ----
    qk_in = (x + posmod_ref[0]).astype(bf16)        # q/k carry pos+mod
    qk = jnp.dot(qk_in, wqk_ref[0],
                 preferred_element_type=jnp.float32) + bqk_ref[0]   # (S, 2D)
    v = jnp.dot(x.astype(bf16), wv_ref[0],
                preferred_element_type=jnp.float32) + bv            # (S, D)
    wo = wo_ref[0]                                  # (D, D) bf16, head-major rows

    # ---- per-head attention (2-D matmuls; scale already folded into Q) ----
    attn_out = jnp.zeros((S, D), jnp.float32)       # fused out-proj accumulator
    attn_avg = jnp.zeros((S, S), jnp.float32)       # head-averaged attention map
    for h in range(H):
        qh = qk[:, h * Dh:(h + 1) * Dh].astype(bf16)            # (S, Dh)
        kh = qk[:, D + h * Dh:D + (h + 1) * Dh].astype(bf16)    # (S, Dh)
        vh = v[:, h * Dh:(h + 1) * Dh].astype(bf16)             # (S, Dh)

        s = jnp.einsum('qd,kd->qk', qh, kh,
                       preferred_element_type=jnp.float32)      # (S, S)
        s = s - jnp.max(s, axis=-1, keepdims=True)
        p = jnp.exp(s)
        p = p / jnp.sum(p, axis=-1, keepdims=True)              # exact softmax
        attn_avg = attn_avg + p

        ctx = jnp.dot(p.astype(bf16), vh,
                      preferred_element_type=jnp.float32)       # (S, Dh)
        # Output projection fused with the head reduction (full-D output).
        attn_out = attn_out + jnp.dot(ctx.astype(bf16),
                                      wo[h * Dh:(h + 1) * Dh, :],
                                      preferred_element_type=jnp.float32)
    attn_out = attn_out + bo
    attn_ref[0, 0] = attn_avg * (1.0 / H)

    # ---- residual + LayerNorm1 ----
    y = _layer_norm(x + attn_out, ln1_w, ln1_b)

    # ---- feed-forward ----
    h1 = jnp.dot(y.astype(bf16), w1_ref[0],
                 preferred_element_type=jnp.float32) + b1_ref[0]
    h1 = jnp.maximum(h1, 0.0)
    h2 = jnp.dot(h1.astype(bf16), w2_ref[0],
                 preferred_element_type=jnp.float32) + b2

    # ---- residual + LayerNorm2 ----
    z = _layer_norm(y + h2, ln2_w, ln2_b)
    x_scr[...] = z                                  # carry to the next layer

    @pl.when(l == num_l - 1)                        # only the last layer survives
    def _():
        out_ref[0] = z.astype(out_ref.dtype)


def _vmem_limit_bytes(kp, S, D, F):
    """Explicit scoped-VMEM limit from the actual resident set (+ margin)."""
    per_layer = sum(math.prod(a.shape[1:]) * a.dtype.itemsize for a in kp.values())
    act_blocks = 2 * S * D * 4                      # src + posmod blocks
    out_blocks = (S * D + S * S) * 4
    scratch = S * D * 4
    intermediates = (3 * S * S + 4 * S * D + 2 * S * F) * 4
    est = 2 * (per_layer + act_blocks + out_blocks) + scratch + intermediates
    est += 2 << 20
    return int(min(max(est, 8 << 20), 64 << 20))


def transformer_encoder_pallas(src_bsd, posmod_bsd, kp, num_layers, num_heads):
    """src_bsd / posmod_bsd: (B, S, D).  Returns (out (B,S,D), attn (L,B,S,S))."""
    B, S, D = src_bsd.shape
    F = kp['w1'].shape[-1]

    def layer_spec(arr):                            # per-layer indexed weights
        nd = arr.ndim
        return pl.BlockSpec((1,) + arr.shape[1:],
                            lambda b, l, _nd=nd: (l,) + (0,) * (_nd - 1))

    act_spec = pl.BlockSpec((1, S, D), lambda b, l: (b, 0, 0))
    in_specs = [act_spec, act_spec,
                layer_spec(kp['wqk']), layer_spec(kp['bqk']),
                layer_spec(kp['wv']), layer_spec(kp['wo']),
                layer_spec(kp['w1']), layer_spec(kp['b1']),
                layer_spec(kp['w2']), layer_spec(kp['vecs'])]
    out_specs = [pl.BlockSpec((1, S, D), lambda b, l: (b, 0, 0)),
                 pl.BlockSpec((1, 1, S, S), lambda b, l: (l, b, 0, 0))]
    out_shape = [jax.ShapeDtypeStruct((B, S, D), jnp.float32),
                 jax.ShapeDtypeStruct((num_layers, B, S, S), jnp.float32)]

    kernel = functools.partial(encoder_stack_kernel, num_heads=num_heads)
    return pl.pallas_call(
        kernel,
        grid=(B, num_layers),
        in_specs=in_specs,
        out_specs=out_specs,
        out_shape=out_shape,
        scratch_shapes=[pltpu.VMEM((S, D), jnp.float32)],
        compiler_params=pltpu.CompilerParams(
            dimension_semantics=("parallel", "arbitrary"),
            vmem_limit_bytes=_vmem_limit_bytes(kp, S, D, F)),
    )(src_bsd, posmod_bsd,
      kp['wqk'], kp['bqk'], kp['wv'], kp['wo'],
      kp['w1'], kp['b1'], kp['w2'], kp['vecs'])


def prepare_params(layer_params, num_layers, num_heads):
    """PyTorch-oriented params -> kernel layout with leading L dim.

    Accepts a single dict (shared by all layers, matching copy.deepcopy at
    init) or a list of per-layer dicts (trained encoder).  Weights are
    pre-transposed to (K, N), Q|K fused, 1/sqrt(Dh) folded into wq/bq."""
    if isinstance(layer_params, dict):
        layer_params = [layer_params] * num_layers
    assert len(layer_params) == num_layers
    bf16 = jnp.bfloat16
    acc = {k: [] for k in ('wqk', 'bqk', 'wv', 'wo', 'w1', 'b1', 'w2', 'vecs')}
    for p in layer_params:
        D = p['wq'].shape[0]
        Dh = D // num_heads
        scale = 1.0 / float(Dh) ** 0.5
        acc['wqk'].append(jnp.concatenate([(p['wq'] * scale).T, p['wk'].T],
                                          axis=1).astype(bf16))            # (D, 2D)
        acc['bqk'].append(jnp.concatenate([p['bq'].reshape(1, D) * scale,
                                           p['bk'].reshape(1, D)], axis=1))  # (1, 2D)
        acc['wv'].append(p['wv'].T.astype(bf16))                            # (D, D)
        acc['wo'].append(p['wo'].T.astype(bf16))                            # (D, D)
        acc['w1'].append(p['w1'].T.astype(bf16))                            # (D, F)
        acc['b1'].append(p['b1'].reshape(1, -1))                            # (1, F)
        acc['w2'].append(p['w2'].T.astype(bf16))                            # (F, D)
        acc['vecs'].append(jnp.stack(
            [p['ln1_w'].reshape(D), p['ln1_b'].reshape(D),
             p['ln2_w'].reshape(D), p['ln2_b'].reshape(D),
             p['bo'].reshape(D), p['b2'].reshape(D), p['bv'].reshape(D)],
            axis=0))                                                        # (7, D)
    return {k: jnp.stack(v, axis=0) for k, v in acc.items()}


def transformer_encoder(src, src_pos, src_mod, layer_params, num_layers,
                        num_heads, norm=None):
    """Mirrors TransformerEncoder.forward.  src/src_pos/src_mod: (S, B, D)."""
    # TODO(synk): src_attn_mask / src_key_padding_mask not implemented (None).
    output = jnp.transpose(src, (1, 0, 2))                  # -> (B, S, D)
    posmod = jnp.transpose(src_pos + src_mod, (1, 0, 2))    # pre-added once
    kp = prepare_params(layer_params, num_layers, num_heads)
    out_bsd, attn = transformer_encoder_pallas(output, posmod, kp,
                                               num_layers, num_heads)
    out = jnp.transpose(out_bsd, (1, 0, 2))                 # back to (S, B, D)
    if norm is not None:
        w, b = norm
        out = _layer_norm(out, w, b)
    list_attn_maps = [attn[i] for i in range(num_layers)]
    return out, list_attn_maps


# ---------------------------------------------------------------------------
# Pure-JAX reference (same bf16/f32 casting as the kernel) for validation.
# ---------------------------------------------------------------------------
def encoder_ref(src_bsd, posmod_bsd, kp, num_layers, num_heads):
    bf16 = jnp.bfloat16
    B, S, D = src_bsd.shape
    H = num_heads
    Dh = D // H
    x = src_bsd
    maps = []
    for l in range(num_layers):
        vecs = kp['vecs'][l]
        ln1_w, ln1_b, ln2_w, ln2_b = vecs[0], vecs[1], vecs[2], vecs[3]
        bo, b2, bv = vecs[4], vecs[5], vecs[6]
        qk_in = (x + posmod_bsd).astype(bf16)
        qk = jnp.einsum('bsd,de->bse', qk_in, kp['wqk'][l],
                        preferred_element_type=jnp.float32) + kp['bqk'][l][0]
        v = jnp.einsum('bsd,de->bse', x.astype(bf16), kp['wv'][l],
                       preferred_element_type=jnp.float32) + bv
        q = qk[..., :D].reshape(B, S, H, Dh)
        k = qk[..., D:].reshape(B, S, H, Dh)
        vh = v.reshape(B, S, H, Dh)
        s = jnp.einsum('bqhd,bkhd->bhqk', q.astype(bf16), k.astype(bf16),
                       preferred_element_type=jnp.float32)
        s = s - jnp.max(s, axis=-1, keepdims=True)
        p = jnp.exp(s)
        p = p / jnp.sum(p, axis=-1, keepdims=True)
        maps.append(jnp.mean(p, axis=1))
        ctx = jnp.einsum('bhqk,bkhd->bqhd', p.astype(bf16), vh.astype(bf16),
                         preferred_element_type=jnp.float32).reshape(B, S, D)
        attn_out = jnp.einsum('bsd,de->bse', ctx.astype(bf16), kp['wo'][l],
                              preferred_element_type=jnp.float32) + bo
        y = _layer_norm(x + attn_out, ln1_w, ln1_b)
        h1 = jnp.maximum(
            jnp.einsum('bsd,df->bsf', y.astype(bf16), kp['w1'][l],
                       preferred_element_type=jnp.float32) + kp['b1'][l][0], 0.0)
        h2 = jnp.einsum('bsf,fd->bsd', h1.astype(bf16), kp['w2'][l],
                        preferred_element_type=jnp.float32) + b2
        x = _layer_norm(y + h2, ln2_w, ln2_b)
    return x, maps


def init_layer_params(key, d_model, dim_ff):
    ks = jax.random.split(key, 8)
    s_d = 1.0 / d_model ** 0.5
    s_f = 1.0 / dim_ff ** 0.5
    f32 = jnp.float32
    return {
        "wq": jax.random.normal(ks[0], (d_model, d_model), f32) * s_d,
        "wk": jax.random.normal(ks[1], (d_model, d_model), f32) * s_d,
        "wv": jax.random.normal(ks[2], (d_model, d_model), f32) * s_d,
        "bq": jnp.zeros((1, d_model), f32),
        "bk": jnp.zeros((1, d_model), f32),
        "bv": jnp.zeros((1, d_model), f32),
        "wo": jax.random.normal(ks[3], (d_model, d_model), f32) * s_d,
        "bo": jnp.zeros((1, d_model), f32),
        "ln1_w": jnp.ones((1, d_model), f32),
        "ln1_b": jnp.zeros((1, d_model), f32),
        "w1": jax.random.normal(ks[4], (dim_ff, d_model), f32) * s_d,
        "b1": jnp.zeros((1, dim_ff), f32),
        "w2": jax.random.normal(ks[5], (d_model, dim_ff), f32) * s_f,
        "b2": jnp.zeros((1, d_model), f32),
        "ln2_w": jnp.ones((1, d_model), f32),
        "ln2_b": jnp.zeros((1, d_model), f32),
    }


if __name__ == "__main__":
    S, B, D = 8, 2, 32            # seq, batch, d_model (small demo shapes)
    NHEAD, DIM_FF, NUM_LAYERS = 4, 64, 2

    key = jax.random.PRNGKey(0)
    k_src, k_pos, k_mod, k_par = jax.random.split(key, 4)
    src = jax.random.normal(k_src, (S, B, D), jnp.float32)
    src_pos = jax.random.normal(k_pos, (S, B, D), jnp.float32)
    src_mod = jax.random.normal(k_mod, (S, B, D), jnp.float32)
    params = init_layer_params(k_par, D, DIM_FF)

    out, attn_maps = transformer_encoder(src, src_pos, src_mod, params,
                                         NUM_LAYERS, NHEAD, norm=None)
    out = jax.block_until_ready(out)
    attn_maps = [jax.block_until_ready(a) for a in attn_maps]

    # Shape / sanity checks.
    assert out.shape == (S, B, D)
    assert len(attn_maps) == NUM_LAYERS and attn_maps[0].shape == (B, S, S)
    assert bool(jnp.all(jnp.isfinite(out)))
    assert bool(jnp.allclose(jnp.sum(attn_maps[0], axis=-1), 1.0, atol=1e-3))

    # Pure-JAX reference check (same casting strategy as the kernel).
    kp = prepare_params(params, NUM_LAYERS, NHEAD)
    ref_bsd, ref_maps = encoder_ref(jnp.transpose(src, (1, 0, 2)),
                                    jnp.transpose(src_pos + src_mod, (1, 0, 2)),
                                    kp, NUM_LAYERS, NHEAD)
    ref_out = jnp.transpose(ref_bsd, (1, 0, 2))
    assert float(jnp.max(jnp.abs(out - ref_out))) < 2e-2
    assert float(jnp.max(jnp.abs(attn_maps[-1] - ref_maps[-1]))) < 5e-3

    print("KERNEL_OK")
</pallas_src>

<mosaic_0001>
module attributes {stable_mosaic.version = 11 : i64} {
  func.func @encoder_stack_kernel(%arg0: i32, %arg1: i32, %arg2: memref<1x8x32xf32, #tpu.memory_space<vmem>>, %arg3: memref<1x8x32xf32, #tpu.memory_space<vmem>>, %arg4: memref<1x32x64xbf16, #tpu.memory_space<vmem>>, %arg5: memref<1x1x64xf32, #tpu.memory_space<vmem>>, %arg6: memref<1x32x32xbf16, #tpu.memory_space<vmem>>, %arg7: memref<1x32x32xbf16, #tpu.memory_space<vmem>>, %arg8: memref<1x32x64xbf16, #tpu.memory_space<vmem>>, %arg9: memref<1x1x64xf32, #tpu.memory_space<vmem>>, %arg10: memref<1x64x32xbf16, #tpu.memory_space<vmem>>, %arg11: memref<1x7x32xf32, #tpu.memory_space<vmem>>, %arg12: memref<1x8x32xf32, #tpu.memory_space<vmem>>, %arg13: memref<1x1x8x8xf32, #tpu.memory_space<vmem>>, %arg14: memref<8x32xf32, #tpu.memory_space<vmem>>) attributes {dimension_semantics = [#tpu.dimension_semantics<parallel>, #tpu.dimension_semantics<arbitrary>], iteration_bounds = array<i64: 2, 2>, scalar_prefetch = 0 : i64, scratch_operands = 1 : i64, tpu.core_type = #tpu.core_type<tc>, window_params = [{transform_indices = @transform_0, window_bounds = array<i64: 1, 8, 32>}, {transform_indices = @transform_1, window_bounds = array<i64: 1, 8, 32>}, {transform_indices = @transform_2, window_bounds = array<i64: 1, 32, 64>}, {transform_indices = @transform_3, window_bounds = array<i64: 1, 1, 64>}, {transform_indices = @transform_4, window_bounds = array<i64: 1, 32, 32>}, {transform_indices = @transform_5, window_bounds = array<i64: 1, 32, 32>}, {transform_indices = @transform_6, window_bounds = array<i64: 1, 32, 64>}, {transform_indices = @transform_7, window_bounds = array<i64: 1, 1, 64>}, {transform_indices = @transform_8, window_bounds = array<i64: 1, 64, 32>}, {transform_indices = @transform_9, window_bounds = array<i64: 1, 7, 32>}, {transform_indices = @transform_10, window_bounds = array<i64: 1, 8, 32>}, {transform_indices = @transform_11, window_bounds = array<i64: 1, 1, 8, 8>}]} {
    %c0_i32 = arith.constant 0 : i32
    %0 = arith.cmpi eq, %arg1, %c0_i32 : i32
    %1 = arith.extui %0 : i1 to i32
    %c0_i32_0 = arith.constant 0 : i32
    %2 = arith.cmpi ne, %1, %c0_i32_0 : i32
    scf.if %2 {
      %c0_73 = arith.constant 0 : index
      %c0_74 = arith.constant 0 : index
      %c0_75 = arith.constant 0 : index
      %199 = vector.load %arg2[%c0_73, %c0_74, %c0_75] : memref<1x8x32xf32, #tpu.memory_space<vmem>>, vector<1x8x32xf32>
      %200 = vector.shape_cast %199 : vector<1x8x32xf32> to vector<8x32xf32>
      %c0_76 = arith.constant 0 : index
      %c0_77 = arith.constant 0 : index
      %201 = vector.load %arg14[%c0_76, %c0_77] : memref<8x32xf32, #tpu.memory_space<vmem>>, vector<8x32xf32>
      tpu.vector_store %arg14[%c0_76, %c0_77], %200 {strides = array<i32>} : memref<8x32xf32, #tpu.memory_space<vmem>>, vector<8x32xf32>,
    } else {
    }
    %c0 = arith.constant 0 : index
    %c0_1 = arith.constant 0 : index
    %3 = vector.load %arg14[%c0, %c0_1] : memref<8x32xf32, #tpu.memory_space<vmem>>, vector<8x32xf32>
    %c0_2 = arith.constant 0 : index
    %c0_3 = arith.constant 0 : index
    %c0_4 = arith.constant 0 : index
    %4 = vector.load %arg11[%c0_2, %c0_3, %c0_4] : memref<1x7x32xf32, #tpu.memory_space<vmem>>, vector<1x7x32xf32>
    %5 = vector.shape_cast %4 : vector<1x7x32xf32> to vector<7x32xf32>
    %6 = vector.extract_strided_slice %5 {offsets = [0, 0], sizes = [1, 32], strides = [1, 1]} : vector<7x32xf32> to vector<1x32xf32>
    %7 = vector.extract_strided_slice %5 {offsets = [1, 0], sizes = [1, 32], strides = [1, 1]} : vector<7x32xf32> to vector<1x32xf32>
    %8 = vector.extract_strided_slice %5 {offsets = [2, 0], sizes = [1, 32], strides = [1, 1]} : vector<7x32xf32> to vector<1x32xf32>
    %9 = vector.extract_strided_slice %5 {offsets = [3, 0], sizes = [1, 32], strides = [1, 1]} : vector<7x32xf32> to vector<1x32xf32>
    %10 = vector.extract_strided_slice %5 {offsets = [4, 0], sizes = [1, 32], strides = [1, 1]} : vector<7x32xf32> to vector<1x32xf32>
    %11 = vector.extract_strided_slice %5 {offsets = [5, 0], sizes = [1, 32], strides = [1, 1]} : vector<7x32xf32> to vector<1x32xf32>
    %12 = vector.extract_strided_slice %5 {offsets = [6, 0], sizes = [1, 32], strides = [1, 1]} : vector<7x32xf32> to vector<1x32xf32>
    %c0_5 = arith.constant 0 : index
    %c0_6 = arith.constant 0 : index
    %c0_7 = arith.constant 0 : index
    %13 = vector.load %arg3[%c0_5, %c0_6, %c0_7] : memref<1x8x32xf32, #tpu.memory_space<vmem>>, vector<1x8x32xf32>
    %14 = vector.shape_cast %13 : vector<1x8x32xf32> to vector<8x32xf32>
    %15 = arith.addf %3, %14 : vector<8x32xf32>
    %16 = arith.truncf %15 : vector<8x32xf32> to vector<8x32xbf16>
    %c0_8 = arith.constant 0 : index
    %c0_9 = arith.constant 0 : index
    %c0_10 = arith.constant 0 : index
    %17 = vector.load %arg4[%c0_8, %c0_9, %c0_10] : memref<1x32x64xbf16, #tpu.memory_space<vmem>>, vector<1x32x64xbf16>
    %18 = vector.shape_cast %17 : vector<1x32x64xbf16> to vector<32x64xbf16>
    %cst = arith.constant dense<0.000000e+00> : vector<8x64xf32>
    %19 = tpu.matmul %16, %18, %cst {dimension_numbers = #tpu.dot_dimension_numbers<[1], [0], [0], [1], [0, 0, 1, 1], [], []>} : vector<8x32xbf16>, vector<32x64xbf16>, vector<8x64xf32> -> vector<8x64xf32>
    %c0_11 = arith.constant 0 : index
    %c0_12 = arith.constant 0 : index
    %c0_13 = arith.constant 0 : index
    %20 = vector.load %arg5[%c0_11, %c0_12, %c0_13] : memref<1x1x64xf32, #tpu.memory_space<vmem>>, vector<1x1x64xf32>
    %21 = vector.shape_cast %20 : vector<1x1x64xf32> to vector<1x64xf32>
    %22 = vector.broadcast %21 : vector<1x64xf32> to vector<8x64xf32>
    %23 = arith.addf %19, %22 : vector<8x64xf32>
    %24 = arith.truncf %3 : vector<8x32xf32> to vector<8x32xbf16>
    %c0_14 = arith.constant 0 : index
    %c0_15 = arith.constant 0 : index
    %c0_16 = arith.constant 0 : index
    %25 = vector.load %arg6[%c0_14, %c0_15, %c0_16] : memref<1x32x32xbf16, #tpu.memory_space<vmem>>, vector<1x32x32xbf16>
    %26 = vector.shape_cast %25 : vector<1x32x32xbf16> to vector<32x32xbf16>
    %cst_17 = arith.constant dense<0.000000e+00> : vector<8x32xf32>
    %27 = tpu.matmul %24, %26, %cst_17 {dimension_numbers = #tpu.dot_dimension_numbers<[1], [0], [0], [1], [0, 0, 1, 1], [], []>} : vector<8x32xbf16>, vector<32x32xbf16>, vector<8x32xf32> -> vector<8x32xf32>
    %28 = vector.broadcast %12 : vector<1x32xf32> to vector<8x32xf32>
    %29 = arith.addf %27, %28 : vector<8x32xf32>
    %c0_18 = arith.constant 0 : index
    %c0_19 = arith.constant 0 : index
    %c0_20 = arith.constant 0 : index
    %30 = vector.load %arg7[%c0_18, %c0_19, %c0_20] : memref<1x32x32xbf16, #tpu.memory_space<vmem>>, vector<1x32x32xbf16>
    %31 = vector.shape_cast %30 : vector<1x32x32xbf16> to vector<32x32xbf16>
    %cst_21 = arith.constant 0.000000e+00 : f32
    %32 = vector.broadcast %cst_21 : f32 to vector<8x32xf32>
    %cst_22 = arith.constant 0.000000e+00 : f32
    %33 = vector.broadcast %cst_22 : f32 to vector<8x8xf32>
    %34 = vector.extract_strided_slice %23 {offsets = [0, 0], sizes = [8, 8], strides = [1, 1]} : vector<8x64xf32> to vector<8x8xf32>
    %35 = arith.truncf %34 : vector<8x8xf32> to vector<8x8xbf16>
    %36 = vector.extract_strided_slice %23 {offsets = [0, 32], sizes = [8, 8], strides = [1, 1]} : vector<8x64xf32> to vector<8x8xf32>
    %37 = arith.truncf %36 : vector<8x8xf32> to vector<8x8xbf16>
    %38 = vector.extract_strided_slice %29 {offsets = [0, 0], sizes = [8, 8], strides = [1, 1]} : vector<8x32xf32> to vector<8x8xf32>
    %39 = arith.truncf %38 : vector<8x8xf32> to vector<8x8xbf16>
    "tpu.trace_start"() <{level = 10 : i32, message = "qd,kd->qk"}> : () -> ()
    %cst_23 = arith.constant dense<0.000000e+00> : vector<8x8xf32>
    %40 = tpu.matmul %35, %37, %cst_23 {dimension_numbers = #tpu.dot_dimension_numbers<[1], [1], [0], [0], [0, 0, 1, 0], [], []>} : vector<8x8xbf16>, vector<8x8xbf16>, vector<8x8xf32> -> vector<8x8xf32>
    "tpu.trace_stop"() : () -> ()
    %cst_24 = arith.constant dense<0xFF800000> : vector<8xf32>
    %41 = vector.multi_reduction <maximumf>, %40, %cst_24 [1] : vector<8x8xf32> to vector<8xf32>
    %42 = vector.shape_cast %41 : vector<8xf32> to vector<8x1xf32>
    %43 = vector.broadcast %42 : vector<8x1xf32> to vector<8x8xf32>
    %44 = arith.subf %40, %43 : vector<8x8xf32>
    %45 = math.exp %44 : vector<8x8xf32>
    %cst_25 = arith.constant dense<0.000000e+00> : vector<8xf32>
    %46 = vector.multi_reduction <add>, %45, %cst_25 [1] : vector<8x8xf32> to vector<8xf32>
    %47 = vector.shape_cast %46 : vector<8xf32> to vector<8x1xf32>
    %48 = vector.broadcast %47 : vector<8x1xf32> to vector<8x8xf32>
    %49 = arith.divf %45, %48 : vector<8x8xf32>
    %50 = arith.addf %33, %49 : vector<8x8xf32>
    %51 = arith.truncf %49 : vector<8x8xf32> to vector<8x8xbf16>
    %cst_26 = arith.constant dense<0.000000e+00> : vector<8x8xf32>
    %52 = tpu.matmul %51, %39, %cst_26 {dimension_numbers = #tpu.dot_dimension_numbers<[1], [0], [0], [1], [0, 0, 1, 1], [], []>} : vector<8x8xbf16>, vector<8x8xbf16>, vector<8x8xf32> -> vector<8x8xf32>
    %53 = arith.truncf %52 : vector<8x8xf32> to vector<8x8xbf16>
    %54 = vector.extract_strided_slice %31 {offsets = [0, 0], sizes = [8, 32], strides = [1, 1]} : vector<32x32xbf16> to vector<8x32xbf16>
    %cst_27 = arith.constant dense<0.000000e+00> : vector<8x32xf32>
    %55 = tpu.matmul %53, %54, %cst_27 {dimension_numbers = #tpu.dot_dimension_numbers<[1], [0], [0], [1], [0, 0, 1, 1], [], []>} : vector<8x8xbf16>, vector<8x32xbf16>, vector<8x32xf32> -> vector<8x32xf32>
    %56 = arith.addf %32, %55 : vector<8x32xf32>
    %57 = vector.extract_strided_slice %23 {offsets = [0, 8], sizes = [8, 8], strides = [1, 1]} : vector<8x64xf32> to vector<8x8xf32>
    %58 = arith.truncf %57 : vector<8x8xf32> to vector<8x8xbf16>
    %59 = vector.extract_strided_slice %23 {offsets = [0, 40], sizes = [8, 8], strides = [1, 1]} : vector<8x64xf32> to vector<8x8xf32>
    %60 = arith.truncf %59 : vector<8x8xf32> to vector<8x8xbf16>
    %61 = vector.extract_strided_slice %29 {offsets = [0, 8], sizes = [8, 8], strides = [1, 1]} : vector<8x32xf32> to vector<8x8xf32>
    %62 = arith.truncf %61 : vector<8x8xf32> to vector<8x8xbf16>
    "tpu.trace_start"() <{level = 10 : i32, message = "qd,kd->qk"}> : () -> ()
    %cst_28 = arith.constant dense<0.000000e+00> : vector<8x8xf32>
    %63 = tpu.matmul %58, %60, %cst_28 {dimension_numbers = #tpu.dot_dimension_numbers<[1], [1], [0], [0], [0, 0, 1, 0], [], []>} : vector<8x8xbf16>, vector<8x8xbf16>, vector<8x8xf32> -> vector<8x8xf32>
    "tpu.trace_stop"() : () -> ()
    %cst_29 = arith.constant dense<0xFF800000> : vector<8xf32>
    %64 = vector.multi_reduction <maximumf>, %63, %cst_29 [1] : vector<8x8xf32> to vector<8xf32>
    %65 = vector.shape_cast %64 : vector<8xf32> to vector<8x1xf32>
    %66 = vector.broadcast %65 : vector<8x1xf32> to vector<8x8xf32>
    %67 = arith.subf %63, %66 : vector<8x8xf32>
    %68 = math.exp %67 : vector<8x8xf32>
    %cst_30 = arith.constant dense<0.000000e+00> : vector<8xf32>
    %69 = vector.multi_reduction <add>, %68, %cst_30 [1] : vector<8x8xf32> to vector<8xf32>
    %70 = vector.shape_cast %69 : vector<8xf32> to vector<8x1xf32>
    %71 = vector.broadcast %70 : vector<8x1xf32> to vector<8x8xf32>
    %72 = arith.divf %68, %71 : vector<8x8xf32>
    %73 = arith.addf %50, %72 : vector<8x8xf32>
    %74 = arith.truncf %72 : vector<8x8xf32> to vector<8x8xbf16>
    %cst_31 = arith.constant dense<0.000000e+00> : vector<8x8xf32>
    %75 = tpu.matmul %74, %62, %cst_31 {dimension_numbers = #tpu.dot_dimension_numbers<[1], [0], [0], [1], [0, 0, 1, 1], [], []>} : vector<8x8xbf16>, vector<8x8xbf16>, vector<8x8xf32> -> vector<8x8xf32>
    %76 = arith.truncf %75 : vector<8x8xf32> to vector<8x8xbf16>
    %77 = vector.extract_strided_slice %31 {offsets = [8, 0], sizes = [8, 32], strides = [1, 1]} : vector<32x32xbf16> to vector<8x32xbf16>
    %cst_32 = arith.constant dense<0.000000e+00> : vector<8x32xf32>
    %78 = tpu.matmul %76, %77, %cst_32 {dimension_numbers = #tpu.dot_dimension_numbers<[1], [0], [0], [1], [0, 0, 1, 1], [], []>} : vector<8x8xbf16>, vector<8x32xbf16>, vector<8x32xf32> -> vector<8x32xf32>
    %79 = arith.addf %56, %78 : vector<8x32xf32>
    %80 = vector.extract_strided_slice %23 {offsets = [0, 16], sizes = [8, 8], strides = [1, 1]} : vector<8x64xf32> to vector<8x8xf32>
    %81 = arith.truncf %80 : vector<8x8xf32> to vector<8x8xbf16>
    %82 = vector.extract_strided_slice %23 {offsets = [0, 48], sizes = [8, 8], strides = [1, 1]} : vector<8x64xf32> to vector<8x8xf32>
    %83 = arith.truncf %82 : vector<8x8xf32> to vector<8x8xbf16>
    %84 = vector.extract_strided_slice %29 {offsets = [0, 16], sizes = [8, 8], strides = [1, 1]} : vector<8x32xf32> to vector<8x8xf32>
    %85 = arith.truncf %84 : vector<8x8xf32> to vector<8x8xbf16>
    "tpu.trace_start"() <{level = 10 : i32, message = "qd,kd->qk"}> : () -> ()
    %cst_33 = arith.constant dense<0.000000e+00> : vector<8x8xf32>
    %86 = tpu.matmul %81, %83, %cst_33 {dimension_numbers = #tpu.dot_dimension_numbers<[1], [1], [0], [0], [0, 0, 1, 0], [], []>} : vector<8x8xbf16>, vector<8x8xbf16>, vector<8x8xf32> -> vector<8x8xf32>
    "tpu.trace_stop"() : () -> ()
    %cst_34 = arith.constant dense<0xFF800000> : vector<8xf32>
    %87 = vector.multi_reduction <maximumf>, %86, %cst_34 [1] : vector<8x8xf32> to vector<8xf32>
    %88 = vector.shape_cast %87 : vector<8xf32> to vector<8x1xf32>
    %89 = vector.broadcast %88 : vector<8x1xf32> to vector<8x8xf32>
    %90 = arith.subf %86, %89 : vector<8x8xf32>
    %91 = math.exp %90 : vector<8x8xf32>
    %cst_35 = arith.constant dense<0.000000e+00> : vector<8xf32>
    %92 = vector.multi_reduction <add>, %91, %cst_35 [1] : vector<8x8xf32> to vector<8xf32>
    %93 = vector.shape_cast %92 : vector<8xf32> to vector<8x1xf32>
    %94 = vector.broadcast %93 : vector<8x1xf32> to vector<8x8xf32>
    %95 = arith.divf %91, %94 : vector<8x8xf32>
    %96 = arith.addf %73, %95 : vector<8x8xf32>
    %97 = arith.truncf %95 : vector<8x8xf32> to vector<8x8xbf16>
    %cst_36 = arith.constant dense<0.000000e+00> : vector<8x8xf32>
    %98 = tpu.matmul %97, %85, %cst_36 {dimension_numbers = #tpu.dot_dimension_numbers<[1], [0], [0], [1], [0, 0, 1, 1], [], []>} : vector<8x8xbf16>, vector<8x8xbf16>, vector<8x8xf32> -> vector<8x8xf32>
    %99 = arith.truncf %98 : vector<8x8xf32> to vector<8x8xbf16>
    %100 = vector.extract_strided_slice %31 {offsets = [16, 0], sizes = [8, 32], strides = [1, 1]} : vector<32x32xbf16> to vector<8x32xbf16>
    %cst_37 = arith.constant dense<0.000000e+00> : vector<8x32xf32>
    %101 = tpu.matmul %99, %100, %cst_37 {dimension_numbers = #tpu.dot_dimension_numbers<[1], [0], [0], [1], [0, 0, 1, 1], [], []>} : vector<8x8xbf16>, vector<8x32xbf16>, vector<8x32xf32> -> vector<8x32xf32>
    %102 = arith.addf %79, %101 : vector<8x32xf32>
    %103 = vector.extract_strided_slice %23 {offsets = [0, 24], sizes = [8, 8], strides = [1, 1]} : vector<8x64xf32> to vector<8x8xf32>
    %104 = arith.truncf %103 : vector<8x8xf32> to vector<8x8xbf16>
    %105 = vector.extract_strided_slice %23 {offsets = [0, 56], sizes = [8, 8], strides = [1, 1]} : vector<8x64xf32> to vector<8x8xf32>
    %106 = arith.truncf %105 : vector<8x8xf32> to vector<8x8xbf16>
    %107 = vector.extract_strided_slice %29 {offsets = [0, 24], sizes = [8, 8], strides = [1, 1]} : vector<8x32xf32> to vector<8x8xf32>
    %108 = arith.truncf %107 : vector<8x8xf32> to vector<8x8xbf16>
    "tpu.trace_start"() <{level = 10 : i32, message = "qd,kd->qk"}> : () -> ()
    %cst_38 = arith.constant dense<0.000000e+00> : vector<8x8xf32>
    %109 = tpu.matmul %104, %106, %cst_38 {dimension_numbers = #tpu.dot_dimension_numbers<[1], [1], [0], [0], [0, 0, 1, 0], [], []>} : vector<8x8xbf16>, vector<8x8xbf16>, vector<8x8xf32> -> vector<8x8xf32>
    "tpu.trace_stop"() : () -> ()
    %cst_39 = arith.constant dense<0xFF800000> : vector<8xf32>
    %110 = vector.multi_reduction <maximumf>, %109, %cst_39 [1] : vector<8x8xf32> to vector<8xf32>
    %111 = vector.shape_cast %110 : vector<8xf32> to vector<8x1xf32>
    %112 = vector.broadcast %111 : vector<8x1xf32> to vector<8x8xf32>
    %113 = arith.subf %109, %112 : vector<8x8xf32>
    %114 = math.exp %113 : vector<8x8xf32>
    %cst_40 = arith.constant dense<0.000000e+00> : vector<8xf32>
    %115 = vector.multi_reduction <add>, %114, %cst_40 [1] : vector<8x8xf32> to vector<8xf32>
    %116 = vector.shape_cast %115 : vector<8xf32> to vector<8x1xf32>
    %117 = vector.broadcast %116 : vector<8x1xf32> to vector<8x8xf32>
    %118 = arith.divf %114, %117 : vector<8x8xf32>
    %119 = arith.addf %96, %118 : vector<8x8xf32>
    %120 = arith.truncf %118 : vector<8x8xf32> to vector<8x8xbf16>
    %cst_41 = arith.constant dense<0.000000e+00> : vector<8x8xf32>
    %121 = tpu.matmul %120, %108, %cst_41 {dimension_numbers = #tpu.dot_dimension_numbers<[1], [0], [0], [1], [0, 0, 1, 1], [], []>} : vector<8x8xbf16>, vector<8x8xbf16>, vector<8x8xf32> -> vector<8x8xf32>
    %122 = arith.truncf %121 : vector<8x8xf32> to vector<8x8xbf16>
    %123 = vector.extract_strided_slice %31 {offsets = [24, 0], sizes = [8, 32], strides = [1, 1]} : vector<32x32xbf16> to vector<8x32xbf16>
    %cst_42 = arith.constant dense<0.000000e+00> : vector<8x32xf32>
    %124 = tpu.matmul %122, %123, %cst_42 {dimension_numbers = #tpu.dot_dimension_numbers<[1], [0], [0], [1], [0, 0, 1, 1], [], []>} : vector<8x8xbf16>, vector<8x32xbf16>, vector<8x32xf32> -> vector<8x32xf32>
    %125 = arith.addf %102, %124 : vector<8x32xf32>
    %126 = vector.broadcast %10 : vector<1x32xf32> to vector<8x32xf32>
    %127 = arith.addf %125, %126 : vector<8x32xf32>
    %cst_43 = arith.constant 2.500000e-01 : f32
    %128 = vector.broadcast %cst_43 : f32 to vector<8x8xf32>
    %129 = arith.mulf %119, %128 : vector<8x8xf32>
    %c0_44 = arith.constant 0 : index
    %c0_45 = arith.constant 0 : index
    %c0_46 = arith.constant 0 : index
    %c0_47 = arith.constant 0 : index
    %130 = vector.load %arg13[%c0_44, %c0_45, %c0_46, %c0_47] : memref<1x1x8x8xf32, #tpu.memory_space<vmem>>, vector<1x1x8x8xf32>
    %131 = vector.shape_cast %130 : vector<1x1x8x8xf32> to vector<8x8xf32>
    %132 = vector.shape_cast %129 : vector<8x8xf32> to vector<1x1x8x8xf32>
    tpu.vector_store %arg13[%c0_44, %c0_45, %c0_46, %c0_47], %132 {strides = array<i32>} : memref<1x1x8x8xf32, #tpu.memory_space<vmem>>, vector<1x1x8x8xf32>,
    %133 = arith.addf %3, %127 : vector<8x32xf32>
    %cst_48 = arith.constant dense<0.000000e+00> : vector<8xf32>
    %134 = vector.multi_reduction <add>, %133, %cst_48 [1] : vector<8x32xf32> to vector<8xf32>
    %135 = vector.shape_cast %134 : vector<8xf32> to vector<8x1xf32>
    %cst_49 = arith.constant 3.200000e+01 : f32
    %136 = vector.broadcast %cst_49 : f32 to vector<8x1xf32>
    %137 = arith.divf %135, %136 : vector<8x1xf32>
    %138 = vector.broadcast %137 : vector<8x1xf32> to vector<8x32xf32>
    %139 = arith.subf %133, %138 : vector<8x32xf32>
    %140 = arith.mulf %139, %139 : vector<8x32xf32>
    %cst_50 = arith.constant dense<0.000000e+00> : vector<8xf32>
    %141 = vector.multi_reduction <add>, %140, %cst_50 [1] : vector<8x32xf32> to vector<8xf32>
    %142 = vector.shape_cast %141 : vector<8xf32> to vector<8x1xf32>
    %cst_51 = arith.constant 3.200000e+01 : f32
    %143 = vector.broadcast %cst_51 : f32 to vector<8x1xf32>
    %144 = arith.divf %142, %143 : vector<8x1xf32>
    %145 = vector.broadcast %137 : vector<8x1xf32> to vector<8x32xf32>
    %146 = arith.subf %133, %145 : vector<8x32xf32>
    %cst_52 = arith.constant 9.99999974E-6 : f32
    %147 = vector.broadcast %cst_52 : f32 to vector<8x1xf32>
    %148 = arith.addf %144, %147 : vector<8x1xf32>
    %149 = math.rsqrt %148 : vector<8x1xf32>
    %150 = vector.broadcast %149 : vector<8x1xf32> to vector<8x32xf32>
    %151 = arith.mulf %146, %150 : vector<8x32xf32>
    %152 = vector.broadcast %6 : vector<1x32xf32> to vector<8x32xf32>
    %153 = arith.mulf %151, %152 : vector<8x32xf32>
    %154 = vector.broadcast %7 : vector<1x32xf32> to vector<8x32xf32>
    %155 = arith.addf %153, %154 : vector<8x32xf32>
    %156 = arith.truncf %155 : vector<8x32xf32> to vector<8x32xbf16>
    %c0_53 = arith.constant 0 : index
    %c0_54 = arith.constant 0 : index
    %c0_55 = arith.constant 0 : index
    %157 = vector.load %arg8[%c0_53, %c0_54, %c0_55] : memref<1x32x64xbf16, #tpu.memory_space<vmem>>, vector<1x32x64xbf16>
    %158 = vector.shape_cast %157 : vector<1x32x64xbf16> to vector<32x64xbf16>
    %cst_56 = arith.constant dense<0.000000e+00> : vector<8x64xf32>
    %159 = tpu.matmul %156, %158, %cst_56 {dimension_numbers = #tpu.dot_dimension_numbers<[1], [0], [0], [1], [0, 0, 1, 1], [], []>} : vector<8x32xbf16>, vector<32x64xbf16>, vector<8x64xf32> -> vector<8x64xf32>
    %c0_57 = arith.constant 0 : index
    %c0_58 = arith.constant 0 : index
    %c0_59 = arith.constant 0 : index
    %160 = vector.load %arg9[%c0_57, %c0_58, %c0_59] : memref<1x1x64xf32, #tpu.memory_space<vmem>>, vector<1x1x64xf32>
    %161 = vector.shape_cast %160 : vector<1x1x64xf32> to vector<1x64xf32>
    %162 = vector.broadcast %161 : vector<1x64xf32> to vector<8x64xf32>
    %163 = arith.addf %159, %162 : vector<8x64xf32>
    %cst_60 = arith.constant 0.000000e+00 : f32
    %164 = vector.broadcast %cst_60 : f32 to vector<8x64xf32>
    %165 = arith.maximumf %163, %164 : vector<8x64xf32>
    %166 = arith.truncf %165 : vector<8x64xf32> to vector<8x64xbf16>
    %c0_61 = arith.constant 0 : index
    %c0_62 = arith.constant 0 : index
    %c0_63 = arith.constant 0 : index
    %167 = vector.load %arg10[%c0_61, %c0_62, %c0_63] : memref<1x64x32xbf16, #tpu.memory_space<vmem>>, vector<1x64x32xbf16>
    %168 = vector.shape_cast %167 : vector<1x64x32xbf16> to vector<64x32xbf16>
    %cst_64 = arith.constant dense<0.000000e+00> : vector<8x32xf32>
    %169 = tpu.matmul %166, %168, %cst_64 {dimension_numbers = #tpu.dot_dimension_numbers<[1], [0], [0], [1], [0, 0, 1, 1], [], []>} : vector<8x64xbf16>, vector<64x32xbf16>, vector<8x32xf32> -> vector<8x32xf32>
    %170 = vector.broadcast %11 : vector<1x32xf32> to vector<8x32xf32>
    %171 = arith.addf %169, %170 : vector<8x32xf32>
    %172 = arith.addf %155, %171 : vector<8x32xf32>
    %cst_65 = arith.constant dense<0.000000e+00> : vector<8xf32>
    %173 = vector.multi_reduction <add>, %172, %cst_65 [1] : vector<8x32xf32> to vector<8xf32>
    %174 = vector.shape_cast %173 : vector<8xf32> to vector<8x1xf32>
    %cst_66 = arith.constant 3.200000e+01 : f32
    %175 = vector.broadcast %cst_66 : f32 to vector<8x1xf32>
    %176 = arith.divf %174, %175 : vector<8x1xf32>
    %177 = vector.broadcast %176 : vector<8x1xf32> to vector<8x32xf32>
    %178 = arith.subf %172, %177 : vector<8x32xf32>
    %179 = arith.mulf %178, %178 : vector<8x32xf32>
    %cst_67 = arith.constant dense<0.000000e+00> : vector<8xf32>
    %180 = vector.multi_reduction <add>, %179, %cst_67 [1] : vector<8x32xf32> to vector<8xf32>
    %181 = vector.shape_cast %180 : vector<8xf32> to vector<8x1xf32>
    %cst_68 = arith.constant 3.200000e+01 : f32
    %182 = vector.broadcast %cst_68 : f32 to vector<8x1xf32>
    %183 = arith.divf %181, %182 : vector<8x1xf32>
    %184 = vector.broadcast %176 : vector<8x1xf32> to vector<8x32xf32>
    %185 = arith.subf %172, %184 : vector<8x32xf32>
    %cst_69 = arith.constant 9.99999974E-6 : f32
    %186 = vector.broadcast %cst_69 : f32 to vector<8x1xf32>
    %187 = arith.addf %183, %186 : vector<8x1xf32>
    %188 = math.rsqrt %187 : vector<8x1xf32>
    %189 = vector.broadcast %188 : vector<8x1xf32> to vector<8x32xf32>
    %190 = arith.mulf %185, %189 : vector<8x32xf32>
    %191 = vector.broadcast %8 : vector<1x32xf32> to vector<8x32xf32>
    %192 = arith.mulf %190, %191 : vector<8x32xf32>
    %193 = vector.broadcast %9 : vector<1x32xf32> to vector<8x32xf32>
    %194 = arith.addf %192, %193 : vector<8x32xf32>
    %c0_70 = arith.constant 0 : index
    %c0_71 = arith.constant 0 : index
    %195 = vector.load %arg14[%c0_70, %c0_71] : memref<8x32xf32, #tpu.memory_space<vmem>>, vector<8x32xf32>
    tpu.vector_store %arg14[%c0_70, %c0_71], %194 {strides = array<i32>} : memref<8x32xf32, #tpu.memory_space<vmem>>, vector<8x32xf32>,
    %c1_i32 = arith.constant 1 : i32
    %196 = arith.cmpi eq, %arg1, %c1_i32 : i32
    %197 = arith.extui %196 : i1 to i32
    %c0_i32_72 = arith.constant 0 : i32
    %198 = arith.cmpi ne, %197, %c0_i32_72 : i32
    scf.if %198 {
      %c0_73 = arith.constant 0 : index
      %c0_74 = arith.constant 0 : index
      %c0_75 = arith.constant 0 : index
      %199 = vector.load %arg12[%c0_73, %c0_74, %c0_75] : memref<1x8x32xf32, #tpu.memory_space<vmem>>, vector<1x8x32xf32>
      %200 = vector.shape_cast %199 : vector<1x8x32xf32> to vector<8x32xf32>
      %201 = vector.shape_cast %194 : vector<8x32xf32> to vector<1x8x32xf32>
      tpu.vector_store %arg12[%c0_73, %c0_74, %c0_75], %201 {strides = array<i32>} : memref<1x8x32xf32, #tpu.memory_space<vmem>>, vector<1x8x32xf32>,
    } else {
    }
    return
  }
  func.func @transform_0(%arg0: i32, %arg1: i32) -> (i32, i32, i32) {
    %c0_i32 = arith.constant 0 : i32
    %c0_i32_0 = arith.constant 0 : i32
    %c0_i32_1 = arith.constant 0 : i32
    return %arg0, %c0_i32, %c0_i32_0 : i32, i32, i32
  }
  func.func @transform_1(%arg0: i32, %arg1: i32) -> (i32, i32, i32) {
    %c0_i32 = arith.constant 0 : i32
    %c0_i32_0 = arith.constant 0 : i32
    %c0_i32_1 = arith.constant 0 : i32
    return %arg0, %c0_i32, %c0_i32_0 : i32, i32, i32
  }
  func.func @transform_2(%arg0: i32, %arg1: i32) -> (i32, i32, i32) {
    %c0_i32 = arith.constant 0 : i32
    %c0_i32_0 = arith.constant 0 : i32
    %c0_i32_1 = arith.constant 0 : i32
    return %arg1, %c0_i32, %c0_i32_0 : i32, i32, i32
  }
  func.func @transform_3(%arg0: i32, %arg1: i32) -> (i32, i32, i32) {
    %c0_i32 = arith.constant 0 : i32
    %c0_i32_0 = arith.constant 0 : i32
    %c0_i32_1 = arith.constant 0 : i32
    return %arg1, %c0_i32, %c0_i32_0 : i32, i32, i32
  }
  func.func @transform_4(%arg0: i32, %arg1: i32) -> (i32, i32, i32) {
    %c0_i32 = arith.constant 0 : i32
    %c0_i32_0 = arith.constant 0 : i32
    %c0_i32_1 = arith.constant 0 : i32
    return %arg1, %c0_i32, %c0_i32_0 : i32, i32, i32
  }
  func.func @transform_5(%arg0: i32, %arg1: i32) -> (i32, i32, i32) {
    %c0_i32 = arith.constant 0 : i32
    %c0_i32_0 = arith.constant 0 : i32
    %c0_i32_1 = arith.constant 0 : i32
    return %arg1, %c0_i32, %c0_i32_0 : i32, i32, i32
  }
  func.func @transform_6(%arg0: i32, %arg1: i32) -> (i32, i32, i32) {
    %c0_i32 = arith.constant 0 : i32
    %c0_i32_0 = arith.constant 0 : i32
    %c0_i32_1 = arith.constant 0 : i32
    return %arg1, %c0_i32, %c0_i32_0 : i32, i32, i32
  }
  func.func @transform_7(%arg0: i32, %arg1: i32) -> (i32, i32, i32) {
    %c0_i32 = arith.constant 0 : i32
    %c0_i32_0 = arith.constant 0 : i32
    %c0_i32_1 = arith.constant 0 : i32
    return %arg1, %c0_i32, %c0_i32_0 : i32, i32, i32
  }
  func.func @transform_8(%arg0: i32, %arg1: i32) -> (i32, i32, i32) {
    %c0_i32 = arith.constant 0 : i32
    %c0_i32_0 = arith.constant 0 : i32
    %c0_i32_1 = arith.constant 0 : i32
    return %arg1, %c0_i32, %c0_i32_0 : i32, i32, i32
  }
  func.func @transform_9(%arg0: i32, %arg1: i32) -> (i32, i32, i32) {
    %c0_i32 = arith.constant 0 : i32
    %c0_i32_0 = arith.constant 0 : i32
    %c0_i32_1 = arith.constant 0 : i32
    return %arg1, %c0_i32, %c0_i32_0 : i32, i32, i32
  }
  func.func @transform_10(%arg0: i32, %arg1: i32) -> (i32, i32, i32) {
    %c0_i32 = arith.constant 0 : i32
    %c0_i32_0 = arith.constant 0 : i32
    %c0_i32_1 = arith.constant 0 : i32
    return %arg0, %c0_i32, %c0_i32_0 : i32, i32, i32
  }
  func.func @transform_11(%arg0: i32, %arg1: i32) -> (i32, i32, i32, i32) {
    %c0_i32 = arith.constant 0 : i32
    %c0_i32_0 = arith.constant 0 : i32
    %c0_i32_1 = arith.constant 0 : i32
    return %arg1, %arg0, %c0_i32, %c0_i32_0 : i32, i32, i32, i32
  }
}

</mosaic_0001>

<llo_original>
// kernel: tpu_custom_call.1
$region0: #{tpu_custom_call.1}
  #allocation0 [shape = 'u32[]', space=smem, size = 0x4, offset = 0x4, fixed_abs, tag = 'smem constant byte address 0x4 - core index']
  #allocation1 [shape = 'u32[144,128]{1,0:T(1,128)}', space=vmem, size = 0x12000, scoped, tag = 'internal scratch']
  #allocation2 [shape = 'f32[8,32]{1,0:T(8,128)}', space=vmem, size = 0x1000, scoped, tag = 'scratch operand']
  %s0 = inlined_call_operand.vmem [shape: f32[2,8,32], index: 0, kind: input, shape index: {}]
  %s1 = inlined_call_operand.hbm [shape: f32[2,8,32], index: 1, kind: input, shape index: {}]
  %s2 = inlined_call_operand.vmem [shape: bf16[2,32,64], index: 2, kind: input, shape index: {}]
  %s3 = inlined_call_operand.vmem [shape: f32[2,1,64], index: 3, kind: input, shape index: {}]
  %s4 = inlined_call_operand.vmem [shape: bf16[2,32,32], index: 4, kind: input, shape index: {}]
  %s5 = inlined_call_operand.vmem [shape: bf16[2,32,32], index: 5, kind: input, shape index: {}]
  %s6 = inlined_call_operand.hbm [shape: bf16[2,32,64], index: 6, kind: input, shape index: {}]
  %s7 = inlined_call_operand.hbm [shape: f32[2,1,64], index: 7, kind: input, shape index: {}]
  %s8 = inlined_call_operand.vmem [shape: bf16[2,64,32], index: 8, kind: input, shape index: {}]
  %s9 = inlined_call_operand.vmem [shape: f32[2,7,32], index: 9, kind: input, shape index: {}]
  %s10 = inlined_call_operand.hbm [shape: f32[2,8,32], index: 10, kind: output, shape index: {0}]
  %s11 = inlined_call_operand.hbm [shape: f32[2,2,8,8], index: 11, kind: output, shape index: {1}]
  %12 = xla_tuple %s10, %s11
  %s13 = sld [smem:[#allocation0]]
  $region101: #{tpu_custom_call.1} parent=0
    _
  %s15 = ssub.s32 1, %s13
  %s16 = scalar_select 0, %s15, %s13
  $region1: #{tpu_custom_call.1} parent=0
    #allocation3 [shape = 'u8[8192]{0}', space=vmem, size = 0x2000, scoped, tag = 'input window, operand 1']
    #allocation4 [shape = 's32[2]{0}', space=sflag, size = 0x8, scoped, tag = 'scoped memory for tpu_custom_call.1']
    #allocation5 [shape = 's32[2]{0}', space=sflag, size = 0x8, scoped, tag = 'scoped memory for tpu_custom_call.1']
    #allocation6 [shape = 'u8[16384]{0}', space=vmem, size = 0x4000, scoped, tag = 'input window, operand 6']
    #allocation7 [shape = 's32[2]{0}', space=sflag, size = 0x8, scoped, tag = 'scoped memory for tpu_custom_call.1']
    #allocation8 [shape = 'u8[1024]{0}', space=vmem, size = 0x400, scoped, tag = 'input window, operand 7']
    #allocation9 [shape = 'u8[8192]{0}', space=vmem, size = 0x2000, scoped, tag = 'output window, operand 0']
    #allocation10 [shape = 'u8[8192]{0}', space=vmem, size = 0x2000, scoped, tag = 'output window, operand 1']
    #allocation11 [shape = 's32[2]{0}', space=sflag, size = 0x8, scoped, tag = 'scoped memory for tpu_custom_call.1']
    %17 = vsyncpa [#allocation4], 0
    %s18 = scalar_lea.sflag [#allocation4], 1
    %19 = vsyncpa %s18, 0
    %20 = vsyncpa [#allocation7], 0
    %s21 = scalar_lea.sflag [#allocation7], 1
    %22 = vsyncpa %s21, 0
    %23 = vsyncpa [#allocation5], 0
    %s24 = scalar_lea.sflag [#allocation5], 1
    %25 = vsyncpa %s24, 0
    %26 = vsyncpa [#allocation11], 0
    %s27 = scalar_lea.sflag [#allocation11], 1
    %28 = vsyncpa %s27, 0
    loop: start=0, step=1, limit=6
    $region2: #{tpu_custom_call.1} parent=1 // loop_pre_header
      _
    $region3: #{tpu_custom_call.1} parent=1 // loop_header
      %s30 = sphi 0, %s34
      %p31 = scmp.ge.s32.totalorder %s30, 6
      %s37 = sphi 0, %s49
      %s38 = sphi 0, %s45
      %s39 = sphi 0, %s37
      %s40 = sphi 0, %s38
      %s41 = sphi 0, %s39
      %s42 = sphi 0, %s40
      %s52 = sphi 0, %s54
      %s55 = sphi 0, %s52
      %s56 = sphi 0, %s55
      %s72 = sphi 0, %s56
      %s78 = sphi 0, %s80
      %s81 = sphi 0, %s78
      %s82 = sphi 0, %s81
      %s98 = sphi 0, %s82
      %s104 = sphi 0, %s106
      %s107 = sphi 0, %s104
      %s108 = sphi 0, %s107
      %s124 = sphi 0, %s108
      %s130 = sphi 0, %s132
      %s133 = sphi 0, %s130
      %s134 = sphi 0, %s133
      %s150 = sphi 0, %s134
      %s156 = sphi 0, %s158
      %s159 = sphi 0, %s156
      %s160 = sphi 0, %s159
      %s176 = sphi 0, %s160
      %s182 = sphi 0, %s184
      %s185 = sphi 0, %s182
      %s186 = sphi 0, %s185
      %s202 = sphi 0, %s186
      %s208 = sphi 0, %s210
      %s211 = sphi 0, %s208
      %s212 = sphi 0, %s211
      %s228 = sphi 0, %s212
      %s234 = sphi 0, %s236
      %s237 = sphi 0, %s234
      %s238 = sphi 0, %s237
      %s254 = sphi 0, %s238
      %s260 = sphi 0, %s262
      %s263 = sphi 0, %s260
      %s264 = sphi 0, %s263
      %s280 = sphi 0, %s264
      %s286 = sphi 0, %s288
      %s289 = sphi 0, %s286
      %s290 = sphi 0, %s289
      %s306 = sphi 0, %s290
      %s312 = sphi 0, %s314
      %s315 = sphi 0, %s312
      %s316 = sphi 0, %s315
      %s332 = sphi 0, %s316
      %s340 = sphi 0, %s342
      %s343 = sphi 0, %s340
      %s344 = sphi 0, %s343
      %s360 = sphi 0, %s344
    $region4: #{tpu_custom_call.1} parent=1 // loop_header_branch
      %33 = sbr.rel (%p31) target = $region8
    $region5: #{tpu_custom_call.1} parent=1 // loop_body
      %s35 = ssub.s32 %s30, 1
      %s36 = ssub.s32 %s30, 2
      %s43 = sadd.s32 1, %s38
      %p44 = scmp.ge.s32.totalorder %s43, 2
      %s45 = scalar_select %p44, 0, %s43
      %s46 = sadd.s32 1, %s37
      %s47 = scalar_select %p44, %s46, %s37
      %p48 = scmp.ge.s32.totalorder %s47, 2
      %s49 = scalar_select %p48, 0, %s47
      %s50 = ssub.s32 %s37, %s49
      %p51 = scmp.eq.s32.totalorder %s50, 0
      %s53 = sadd.s32 %s52, 1
      %s54 = scalar_select %p51, %s52, %s53
      %p57 = pneg %p51
      %p58 = scmp.eq.s32.totalorder %s30, 3
      %p59 = por %p57, %p58
      %p60 = scmp.ne.s32.totalorder %s52, %s55
      %p61 = scmp.eq.s32.totalorder %s30, 0
      %p62 = por %p60, %p61
      %p63 = scmp.ne.s32.totalorder %s52, %s55
      %p64 = scmp.eq.s32.totalorder %s35, 3
      %p65 = por %p63, %p64
      %p66 = scmp.ne.s32.totalorder %s55, %s56
      %p67 = scmp.eq.s32.totalorder %s35, 0
      %p68 = por %p66, %p67
      %p69 = scmp.ne.s32.totalorder %s55, %s56
      %p70 = scmp.eq.s32.totalorder %s36, 3
      %p71 = por %p69, %p70
      %p73 = scmp.ne.s32.totalorder %s56, %s72
      %p74 = scmp.eq.s32.totalorder %s36, 0
      %p75 = por %p73, %p74
      %s76 = ssub.s32 %s37, %s49
      %p77 = scmp.eq.s32.totalorder %s76, 0
      %s79 = sadd.s32 %s78, 1
      %s80 = scalar_select %p77, %s78, %s79
      %p83 = pneg %p77
      %p84 = scmp.eq.s32.totalorder %s30, 3
      %p85 = por %p83, %p84
      %p86 = scmp.ne.s32.totalorder %s78, %s81
      %p87 = scmp.eq.s32.totalorder %s30, 0
      %p88 = por %p86, %p87
      %p89 = scmp.ne.s32.totalorder %s78, %s81
      %p90 = scmp.eq.s32.totalorder %s35, 3
      %p91 = por %p89, %p90
      %p92 = scmp.ne.s32.totalorder %s81, %s82
      %p93 = scmp.eq.s32.totalorder %s35, 0
      %p94 = por %p92, %p93
      %p95 = scmp.ne.s32.totalorder %s81, %s82
      %p96 = scmp.eq.s32.totalorder %s36, 3
      %p97 = por %p95, %p96
      %p99 = scmp.ne.s32.totalorder %s82, %s98
      %p100 = scmp.eq.s32.totalorder %s36, 0
      %p101 = por %p99, %p100
      %s102 = ssub.s32 %s38, %s45
      %p103 = scmp.eq.s32.totalorder %s102, 0
      %s105 = sadd.s32 %s104, 1
      %s106 = scalar_select %p103, %s104, %s105
      %p109 = pneg %p103
      %p110 = scmp.eq.s32.totalorder %s30, 3
      %p111 = por %p109, %p110
      %p112 = scmp.ne.s32.totalorder %s104, %s107
      %p113 = scmp.eq.s32.totalorder %s30, 0
      %p114 = por %p112, %p113
      %p115 = scmp.ne.s32.totalorder %s104, %s107
      %p116 = scmp.eq.s32.totalorder %s35, 3
      %p117 = por %p115, %p116
      %p118 = scmp.ne.s32.totalorder %s107, %s108
      %p119 = scmp.eq.s32.totalorder %s35, 0
      %p120 = por %p118, %p119
      %p121 = scmp.ne.s32.totalorder %s107, %s108
      %p122 = scmp.eq.s32.totalorder %s36, 3
      %p123 = por %p121, %p122
      %p125 = scmp.ne.s32.totalorder %s108, %s124
      %p126 = scmp.eq.s32.totalorder %s36, 0
      %p127 = por %p125, %p126
      %s128 = ssub.s32 %s38, %s45
      %p129 = scmp.eq.s32.totalorder %s128, 0
      %s131 = sadd.s32 %s130, 1
      %s132 = scalar_select %p129, %s130, %s131
      %p135 = pneg %p129
      %p136 = scmp.eq.s32.totalorder %s30, 3
      %p137 = por %p135, %p136
      %p138 = scmp.ne.s32.totalorder %s130, %s133
      %p139 = scmp.eq.s32.totalorder %s30, 0
      %p140 = por %p138, %p139
      %p141 = scmp.ne.s32.totalorder %s130, %s133
      %p142 = scmp.eq.s32.totalorder %s35, 3
      %p143 = por %p141, %p142
      %p144 = scmp.ne.s32.totalorder %s133, %s134
      %p145 = scmp.eq.s32.totalorder %s35, 0
      %p146 = por %p144, %p145
      %p147 = scmp.ne.s32.totalorder %s133, %s134
      %p148 = scmp.eq.s32.totalorder %s36, 3
      %p149 = por %p147, %p148
      %p151 = scmp.ne.s32.totalorder %s134, %s150
      %p152 = scmp.eq.s32.totalorder %s36, 0
      %p153 = por %p151, %p152
      %s154 = ssub.s32 %s38, %s45
      %p155 = scmp.eq.s32.totalorder %s154, 0
      %s157 = sadd.s32 %s156, 1
      %s158 = scalar_select %p155, %s156, %s157
      %p161 = pneg %p155
      %p162 = scmp.eq.s32.totalorder %s30, 3
      %p163 = por %p161, %p162
      %p164 = scmp.ne.s32.totalorder %s156, %s159
      %p165 = scmp.eq.s32.totalorder %s30, 0
      %p166 = por %p164, %p165
      %p167 = scmp.ne.s32.totalorder %s156, %s159
      %p168 = scmp.eq.s32.totalorder %s35, 3
      %p169 = por %p167, %p168
      %p170 = scmp.ne.s32.totalorder %s159, %s160
      %p171 = scmp.eq.s32.totalorder %s35, 0
      %p172 = por %p170, %p171
      %p173 = scmp.ne.s32.totalorder %s159, %s160
      %p174 = scmp.eq.s32.totalorder %s36, 3
      %p175 = por %p173, %p174
      %p177 = scmp.ne.s32.totalorder %s160, %s176
      %p178 = scmp.eq.s32.totalorder %s36, 0
      %p179 = por %p177, %p178
      %s180 = ssub.s32 %s38, %s45
      %p181 = scmp.eq.s32.totalorder %s180, 0
      %s183 = sadd.s32 %s182, 1
      %s184 = scalar_select %p181, %s182, %s183
      %p187 = pneg %p181
      %p188 = scmp.eq.s32.totalorder %s30, 3
      %p189 = por %p187, %p188
      %p190 = scmp.ne.s32.totalorder %s182, %s185
      %p191 = scmp.eq.s32.totalorder %s30, 0
      %p192 = por %p190, %p191
      %p193 = scmp.ne.s32.totalorder %s182, %s185
      %p194 = scmp.eq.s32.totalorder %s35, 3
      %p195 = por %p193, %p194
      %p196 = scmp.ne.s32.totalorder %s185, %s186
      %p197 = scmp.eq.s32.totalorder %s35, 0
      %p198 = por %p196, %p197
      %p199 = scmp.ne.s32.totalorder %s185, %s186
      %p200 = scmp.eq.s32.totalorder %s36, 3
      %p201 = por %p199, %p200
      %p203 = scmp.ne.s32.totalorder %s186, %s202
      %p204 = scmp.eq.s32.totalorder %s36, 0
      %p205 = por %p203, %p204
      %s206 = ssub.s32 %s38, %s45
      %p207 = scmp.eq.s32.totalorder %s206, 0
      %s209 = sadd.s32 %s208, 1
      %s210 = scalar_select %p207, %s208, %s209
      %p213 = pneg %p207
      %p214 = scmp.eq.s32.totalorder %s30, 3
      %p215 = por %p213, %p214
      %p216 = scmp.ne.s32.totalorder %s208, %s211
      %p217 = scmp.eq.s32.totalorder %s30, 0
      %p218 = por %p216, %p217
      %p219 = scmp.ne.s32.totalorder %s208, %s211
      %p220 = scmp.eq.s32.totalorder %s35, 3
      %p221 = por %p219, %p220
      %p222 = scmp.ne.s32.totalorder %s211, %s212
      %p223 = scmp.eq.s32.totalorder %s35, 0
      %p224 = por %p222, %p223
      %p225 = scmp.ne.s32.totalorder %s211, %s212
      %p226 = scmp.eq.s32.totalorder %s36, 3
      %p227 = por %p225, %p226
      %p229 = scmp.ne.s32.totalorder %s212, %s228
      %p230 = scmp.eq.s32.totalorder %s36, 0
      %p231 = por %p229, %p230
      %s232 = ssub.s32 %s38, %s45
      %p233 = scmp.eq.s32.totalorder %s232, 0
      %s235 = sadd.s32 %s234, 1
      %s236 = scalar_select %p233, %s234, %s235
      %p239 = pneg %p233
      %p240 = scmp.eq.s32.totalorder %s30, 3
      %p241 = por %p239, %p240
      %p242 = scmp.ne.s32.totalorder %s234, %s237
      %p243 = scmp.eq.s32.totalorder %s30, 0
      %p244 = por %p242, %p243
      %p245 = scmp.ne.s32.totalorder %s234, %s237
      %p246 = scmp.eq.s32.totalorder %s35, 3
      %p247 = por %p245, %p246
      %p248 = scmp.ne.s32.totalorder %s237, %s238
      %p249 = scmp.eq.s32.totalorder %s35, 0
      %p250 = por %p248, %p249
      %p251 = scmp.ne.s32.totalorder %s237, %s238
      %p252 = scmp.eq.s32.totalorder %s36, 3
      %p253 = por %p251, %p252
      %p255 = scmp.ne.s32.totalorder %s238, %s254
      %p256 = scmp.eq.s32.totalorder %s36, 0
      %p257 = por %p255, %p256
      %s258 = ssub.s32 %s38, %s45
      %p259 = scmp.eq.s32.totalorder %s258, 0
      %s261 = sadd.s32 %s260, 1
      %s262 = scalar_select %p259, %s260, %s261
      %p265 = pneg %p259
      %p266 = scmp.eq.s32.totalorder %s30, 3
      %p267 = por %p265, %p266
      %p268 = scmp.ne.s32.totalorder %s260, %s263
      %p269 = scmp.eq.s32.totalorder %s30, 0
      %p270 = por %p268, %p269
      %p271 = scmp.ne.s32.totalorder %s260, %s263
      %p272 = scmp.eq.s32.totalorder %s35, 3
      %p273 = por %p271, %p272
      %p274 = scmp.ne.s32.totalorder %s263, %s264
      %p275 = scmp.eq.s32.totalorder %s35, 0
      %p276 = por %p274, %p275
      %p277 = scmp.ne.s32.totalorder %s263, %s264
      %p278 = scmp.eq.s32.totalorder %s36, 3
      %p279 = por %p277, %p278
      %p281 = scmp.ne.s32.totalorder %s264, %s280
      %p282 = scmp.eq.s32.totalorder %s36, 0
      %p283 = por %p281, %p282
      %s284 = ssub.s32 %s38, %s45
      %p285 = scmp.eq.s32.totalorder %s284, 0
      %s287 = sadd.s32 %s286, 1
      %s288 = scalar_select %p285, %s286, %s287
      %p291 = pneg %p285
      %p292 = scmp.eq.s32.totalorder %s30, 3
      %p293 = por %p291, %p292
      %p294 = scmp.ne.s32.totalorder %s286, %s289
      %p295 = scmp.eq.s32.totalorder %s30, 0
      %p296 = por %p294, %p295
      %p297 = scmp.ne.s32.totalorder %s286, %s289
      %p298 = scmp.eq.s32.totalorder %s35, 3
      %p299 = por %p297, %p298
      %p300 = scmp.ne.s32.totalorder %s289, %s290
      %p301 = scmp.eq.s32.totalorder %s35, 0
      %p302 = por %p300, %p301
      %p303 = scmp.ne.s32.totalorder %s289, %s290
      %p304 = scmp.eq.s32.totalorder %s36, 3
      %p305 = por %p303, %p304
      %p307 = scmp.ne.s32.totalorder %s290, %s306
      %p308 = scmp.eq.s32.totalorder %s36, 0
      %p309 = por %p307, %p308
      %s310 = ssub.s32 %s37, %s49
      %p311 = scmp.eq.s32.totalorder %s310, 0
      %s313 = sadd.s32 %s312, 1
      %s314 = scalar_select %p311, %s312, %s313
      %p317 = pneg %p311
      %p318 = scmp.eq.s32.totalorder %s30, 3
      %p319 = por %p317, %p318
      %p320 = scmp.ne.s32.totalorder %s312, %s315
      %p321 = scmp.eq.s32.totalorder %s30, 0
      %p322 = por %p320, %p321
      %p323 = scmp.ne.s32.totalorder %s312, %s315
      %p324 = scmp.eq.s32.totalorder %s35, 3
      %p325 = por %p323, %p324
      %p326 = scmp.ne.s32.totalorder %s315, %s316
      %p327 = scmp.eq.s32.totalorder %s35, 0
      %p328 = por %p326, %p327
      %p329 = scmp.ne.s32.totalorder %s315, %s316
      %p330 = scmp.eq.s32.totalorder %s36, 3
      %p331 = por %p329, %p330
      %p333 = scmp.ne.s32.totalorder %s316, %s332
      %p334 = scmp.eq.s32.totalorder %s36, 0
      %p335 = por %p333, %p334
      %s336 = ssub.s32 %s38, %s45
      %s337 = ssub.s32 %s37, %s49
      %s338 = sor.u32 %s336, %s337
      %p339 = scmp.eq.s32.totalorder %s338, 0
      %s341 = sadd.s32 %s340, 1
      %s342 = scalar_select %p339, %s340, %s341
      %p345 = pneg %p339
      %p346 = scmp.eq.s32.totalorder %s30, 3
      %p347 = por %p345, %p346
      %p348 = scmp.ne.s32.totalorder %s340, %s343
      %p349 = scmp.eq.s32.totalorder %s30, 0
      %p350 = por %p348, %p349
      %p351 = scmp.ne.s32.totalorder %s340, %s343
      %p352 = scmp.eq.s32.totalorder %s35, 3
      %p353 = por %p351, %p352
      %p354 = scmp.ne.s32.totalorder %s343, %s344
      %p355 = scmp.eq.s32.totalorder %s35, 0
      %p356 = por %p354, %p355
      %p357 = scmp.ne.s32.totalorder %s343, %s344
      %p358 = scmp.eq.s32.totalorder %s36, 3
      %p359 = por %p357, %p358
      %p361 = scmp.ne.s32.totalorder %s344, %s360
      %p362 = scmp.eq.s32.totalorder %s36, 0
      %p363 = por %p361, %p362
      %p364 = scmp.le.s32.totalorder 1, %s30
      %p365 = scmp.lt.s32.totalorder %s30, 5
      %p366 = pnand %p364, %p365
      %p367 = pneg %p366
      // Predicated region
      $region9: #{tpu_custom_call.1} parent=5 // pred_check
        _
      $region10: #{tpu_custom_call.1} parent=5 // pred_check_branch
        %369 = sbr.rel (%p366) target = $region12
      $region11: #{tpu_custom_call.1} parent=5 // pred_region
        %s370 = ssub.s32 %s30, 1
      $region12: #{tpu_custom_call.1} parent=5 // pred_fallthru
        _
      %p371 = scmp.lt.s32.totalorder %s30, 4
      // Predicated region
      $region13: #{tpu_custom_call.1} parent=5 // pred_check
        %p372 = pneg %p371
      $region14: #{tpu_custom_call.1} parent=5 // pred_check_branch
        %374 = sbr.rel (%p372) target = $region16
      $region15: #{tpu_custom_call.1} parent=5 // pred_region
        // Predicated region
        $region17: #{tpu_custom_call.1} parent=15 // pred_check
          %p375 = pneg %p62
        $region18: #{tpu_custom_call.1} parent=15 // pred_check_branch
          %377 = sbr.rel (%p375) target = $region20
        $region19: #{tpu_custom_call.1} parent=15 // pred_region
          %p378 = scmp.lt.s32.totalorder %s37, 1
          %s379 = scalar_select %p378, %s37, 1
          %s380 = smul.addr %s379, 8
          %s381 = scalar_lea.vmem %s0, %s380
        $region20: #{tpu_custom_call.1} parent=15 // pred_fallthru
          _
        // Predicated region
        $region21: #{tpu_custom_call.1} parent=15 // pred_check
          %p382 = pneg %p88
        $region22: #{tpu_custom_call.1} parent=15 // pred_check_branch
          %384 = sbr.rel (%p382) target = $region24
        $region23: #{tpu_custom_call.1} parent=15 // pred_region
          %s385 = sand.u32 %s78, 1
          %s386 = scalar_lea.sflag [#allocation4], %s385
          %s387 = sand.u32 %s78, 1
          %s388 = smul.addr %s387, 8
          %s389 = scalar_lea.vmem [#allocation3], %s388
          %s391 = ssub.s32 128, 128
          %392 = vsyncadd %s386, %s391
          %s393 = smul.addr %s37, 128
          %s394 = scalar_lea.hbm %s1, %s393
          %s396 = sshll.u32 %s389, 4
          %s397 = int_to_ptr.vmem [resolvable:$true] %s396
          %399 = dma.hbm_to_vmem [thread:$0]  %s394, 128, %s397, %s386
        $region24: #{tpu_custom_call.1} parent=15 // pred_fallthru
          _
        // Predicated region
        $region25: #{tpu_custom_call.1} parent=15 // pred_check
          %p400 = pneg %p114
        $region26: #{tpu_custom_call.1} parent=15 // pred_check_branch
          %402 = sbr.rel (%p400) target = $region28
        $region27: #{tpu_custom_call.1} parent=15 // pred_region
          %p403 = scmp.lt.s32.totalorder %s38, 1
          %s404 = scalar_select %p403, %s38, 1
          %s405 = smul.addr %s404, 4
          %s406 = smul.addr %s405, 4
          %s407 = scalar_lea.vmem %s2, %s406
        $region28: #{tpu_custom_call.1} parent=15 // pred_fallthru
          _
        // Predicated region
        $region29: #{tpu_custom_call.1} parent=15 // pred_check
          %p408 = pneg %p140
        $region30: #{tpu_custom_call.1} parent=15 // pred_check_branch
          %410 = sbr.rel (%p408) target = $region32
        $region31: #{tpu_custom_call.1} parent=15 // pred_region
          %p411 = scmp.lt.s32.totalorder %s38, 1
          %s412 = scalar_select %p411, %s38, 1
          %s413 = scalar_lea.vmem %s3, %s412
        $region32: #{tpu_custom_call.1} parent=15 // pred_fallthru
          _
        // Predicated region
        $region33: #{tpu_custom_call.1} parent=15 // pred_check
          %p414 = pneg %p166
        $region34: #{tpu_custom_call.1} parent=15 // pred_check_branch
          %416 = sbr.rel (%p414) target = $region36
        $region35: #{tpu_custom_call.1} parent=15 // pred_region
          %p417 = scmp.lt.s32.totalorder %s38, 1
          %s418 = scalar_select %p417, %s38, 1
          %s419 = smul.addr %s418, 4
          %s420 = smul.addr %s419, 4
          %s421 = scalar_lea.vmem %s4, %s420
        $region36: #{tpu_custom_call.1} parent=15 // pred_fallthru
          _
        // Predicated region
        $region37: #{tpu_custom_call.1} parent=15 // pred_check
          %p422 = pneg %p192
        $region38: #{tpu_custom_call.1} parent=15 // pred_check_branch
          %424 = sbr.rel (%p422) target = $region40
        $region39: #{tpu_custom_call.1} parent=15 // pred_region
          %p425 = scmp.lt.s32.totalorder %s38, 1
          %s426 = scalar_select %p425, %s38, 1
          %s427 = smul.addr %s426, 4
          %s428 = smul.addr %s427, 4
          %s429 = scalar_lea.vmem %s5, %s428
        $region40: #{tpu_custom_call.1} parent=15 // pred_fallthru
          _
        // Predicated region
        $region41: #{tpu_custom_call.1} parent=15 // pred_check
          %p430 = pneg %p218
        $region42: #{tpu_custom_call.1} parent=15 // pred_check_branch
          %432 = sbr.rel (%p430) target = $region44
        $region43: #{tpu_custom_call.1} parent=15 // pred_region
          %s433 = sand.u32 %s30, 1
          %s434 = scalar_lea.sflag [#allocation7], %s433
          %s435 = sand.u32 %s208, 1
          %s436 = smul.addr %s435, 16
          %s437 = scalar_lea.vmem [#allocation6], %s436
          %s439 = ssub.s32 256, 256
          %440 = vsyncadd %s434, %s439
          %s441 = smul.addr %s38, 4
          %s442 = smul.addr %s441, 64
          %s443 = scalar_lea.hbm %s6, %s442
          %s444 = sshll.u32 %s437, 4
          %s445 = int_to_ptr.vmem [resolvable:$true] %s444
          %450 = dma.hbm_to_vmem [thread:$0]  %s443, 256, %s445, %s434, 64, 64, 4
        $region44: #{tpu_custom_call.1} parent=15 // pred_fallthru
          _
        // Predicated region
        $region45: #{tpu_custom_call.1} parent=15 // pred_check
          %p451 = pneg %p244
        $region46: #{tpu_custom_call.1} parent=15 // pred_check_branch
          %453 = sbr.rel (%p451) target = $region48
        $region47: #{tpu_custom_call.1} parent=15 // pred_region
          %s454 = sand.u32 %s30, 1
          %s455 = scalar_lea.sflag [#allocation7], %s454
          %s456 = sand.u32 %s234, 1
          %s457 = scalar_lea.vmem [#allocation8], %s456
          %s459 = ssub.s32 16, 16
          %460 = vsyncadd %s455, %s459
          %s461 = smul.addr %s38, 16
          %s462 = scalar_lea.hbm %s7, %s461
          %s464 = sshll.u32 %s457, 4
          %s465 = int_to_ptr.vmem [resolvable:$true] %s464
          %467 = dma.hbm_to_vmem [thread:$0]  %s462, 16, %s465, %s455
        $region48: #{tpu_custom_call.1} parent=15 // pred_fallthru
          _
        // Predicated region
        $region49: #{tpu_custom_call.1} parent=15 // pred_check
          %p468 = pneg %p270
        $region50: #{tpu_custom_call.1} parent=15 // pred_check_branch
          %470 = sbr.rel (%p468) target = $region52
        $region51: #{tpu_custom_call.1} parent=15 // pred_region
          %p471 = scmp.lt.s32.totalorder %s38, 1
          %s472 = scalar_select %p471, %s38, 1
          %s473 = smul.addr %s472, 8
          %s474 = smul.addr %s473, 4
          %s475 = scalar_lea.vmem %s8, %s474
        $region52: #{tpu_custom_call.1} parent=15 // pred_fallthru
          _
        // Predicated region
        $region53: #{tpu_custom_call.1} parent=15 // pred_check
          %p476 = pneg %p296
        $region54: #{tpu_custom_call.1} parent=15 // pred_check_branch
          %478 = sbr.rel (%p476) target = $region56
        $region55: #{tpu_custom_call.1} parent=15 // pred_region
          %p479 = scmp.lt.s32.totalorder %s38, 1
          %s480 = scalar_select %p479, %s38, 1
          %s481 = smul.addr %s480, 8
          %s482 = scalar_lea.vmem %s9, %s481
        $region56: #{tpu_custom_call.1} parent=15 // pred_fallthru
          _
      $region16: #{tpu_custom_call.1} parent=5 // pred_fallthru
        _
      %p483 = scmp.le.s32.totalorder 1, %s30
      %p484 = scmp.lt.s32.totalorder %s30, 5
      %p485 = pnand %p483, %p484
      %p486 = pneg %p485
      // Predicated region
      $region57: #{tpu_custom_call.1} parent=5 // pred_check
        _
      $region58: #{tpu_custom_call.1} parent=5 // pred_check_branch
        %488 = sbr.rel (%p485) target = $region60
      $region59: #{tpu_custom_call.1} parent=5 // pred_region
        %s489 = ssub.s32 %s30, 1
        %s490 = sand.u32 %s81, 1
        %s491 = scalar_lea.sflag [#allocation4], %s490
        %s492 = sand.u32 %s81, 1
        %s493 = smul.addr %s492, 8
        %s494 = scalar_lea.vmem [#allocation3], %s493
        // Predicated region
        $region61: #{tpu_custom_call.1} parent=59 // pred_check
          %p495 = pneg %p94
        $region62: #{tpu_custom_call.1} parent=59 // pred_check_branch
          %497 = sbr.rel (%p495) target = $region64
        $region63: #{tpu_custom_call.1} parent=59 // pred_region
          %498 = dma.done %s491, 128
        $region64: #{tpu_custom_call.1} parent=59 // pred_fallthru
          _
        %s499 = sand.u32 %s35, 1
        %s500 = scalar_lea.sflag [#allocation7], %s499
        %s501 = sand.u32 %s211, 1
        %s502 = smul.addr %s501, 16
        %s503 = scalar_lea.vmem [#allocation6], %s502
        // Predicated region
        $region65: #{tpu_custom_call.1} parent=59 // pred_check
          %p504 = pneg %p224
        $region66: #{tpu_custom_call.1} parent=59 // pred_check_branch
          %506 = sbr.rel (%p504) target = $region68
        $region67: #{tpu_custom_call.1} parent=59 // pred_region
          %507 = dma.done %s500, 256
        $region68: #{tpu_custom_call.1} parent=59 // pred_fallthru
          _
        %s508 = sand.u32 %s35, 1
        %s509 = scalar_lea.sflag [#allocation7], %s508
        %s510 = sand.u32 %s237, 1
        %s511 = scalar_lea.vmem [#allocation8], %s510
        // Predicated region
        $region69: #{tpu_custom_call.1} parent=59 // pred_check
          %p512 = pneg %p250
        $region70: #{tpu_custom_call.1} parent=59 // pred_check_branch
          %514 = sbr.rel (%p512) target = $region72
        $region71: #{tpu_custom_call.1} parent=59 // pred_region
          %515 = dma.done %s509, 16
        $region72: #{tpu_custom_call.1} parent=59 // pred_fallthru
          _
        %p516 = scmp.lt.s32.totalorder %s39, 1
        %s517 = scalar_select %p516, %s39, 1
        %s518 = smul.addr %s517, 8
        %s519 = scalar_lea.vmem %s0, %s518
        %p520 = pneg %p68
        %p521 = pneg %p65
        %s522 = sand.u32 %s81, 1
        %s523 = scalar_lea.sflag [#allocation4], %s522
        %s524 = sand.u32 %s81, 1
        %s525 = smul.addr %s524, 8
        %s526 = scalar_lea.vmem [#allocation3], %s525
        %p527 = pneg %p94
        %p528 = pneg %p91
        %p529 = scmp.lt.s32.totalorder %s40, 1
        %s530 = scalar_select %p529, %s40, 1
        %s531 = smul.addr %s530, 4
        %s532 = smul.addr %s531, 4
        %s533 = scalar_lea.vmem %s2, %s532
        %p534 = pneg %p120
        %p535 = pneg %p117
        %p536 = scmp.lt.s32.totalorder %s40, 1
        %s537 = scalar_select %p536, %s40, 1
        %s538 = scalar_lea.vmem %s3, %s537
        %p539 = pneg %p146
        %p540 = pneg %p143
        %p541 = scmp.lt.s32.totalorder %s40, 1
        %s542 = scalar_select %p541, %s40, 1
        %s543 = smul.addr %s542, 4
        %s544 = smul.addr %s543, 4
        %s545 = scalar_lea.vmem %s4, %s544
        %p546 = pneg %p172
        %p547 = pneg %p169
        %p548 = scmp.lt.s32.totalorder %s40, 1
        %s549 = scalar_select %p548, %s40, 1
        %s550 = smul.addr %s549, 4
        %s551 = smul.addr %s550, 4
        %s552 = scalar_lea.vmem %s5, %s551
        %p553 = pneg %p198
        %p554 = pneg %p195
        %s555 = sand.u32 %s35, 1
        %s556 = scalar_lea.sflag [#allocation7], %s555
        %s557 = sand.u32 %s211, 1
        %s558 = smul.addr %s557, 16
        %s559 = scalar_lea.vmem [#allocation6], %s558
        %p560 = pneg %p224
        %p561 = pneg %p221
        %s562 = sand.u32 %s35, 1
        %s563 = scalar_lea.sflag [#allocation7], %s562
        %s564 = sand.u32 %s237, 1
        %s565 = scalar_lea.vmem [#allocation8], %s564
        %p566 = pneg %p250
        %p567 = pneg %p247
        %p568 = scmp.lt.s32.totalorder %s40, 1
        %s569 = scalar_select %p568, %s40, 1
        %s570 = smul.addr %s569, 8
        %s571 = smul.addr %s570, 4
        %s572 = scalar_lea.vmem %s8, %s571
        %p573 = pneg %p276
        %p574 = pneg %p273
        %p575 = scmp.lt.s32.totalorder %s40, 1
        %s576 = scalar_select %p575, %s40, 1
        %s577 = smul.addr %s576, 8
        %s578 = scalar_lea.vmem %s9, %s577
        %p579 = pneg %p302
        %p580 = pneg %p299
        %p581 = pneg %p328
        %p582 = pneg %p325
        %s583 = sand.u32 %s315, 1
        %s584 = scalar_lea.sflag [#allocation5], %s583
        %s585 = sand.u32 %s315, 1
        %s586 = smul.addr %s585, 8
        %s587 = scalar_lea.vmem [#allocation9], %s586
        %p588 = pneg %p356
        %p589 = pneg %p353
        %s590 = sand.u32 %s343, 1
        %s591 = scalar_lea.sflag [#allocation11], %s590
        %s592 = sand.u32 %s343, 1
        %s593 = smul.addr %s592, 8
        %s594 = scalar_lea.vmem [#allocation10], %s593
        %p595 = scmp.lt.s32.totalorder %s39, 1
        %s596 = scalar_select %p595, %s39, 1
        %s597 = smul.addr %s596, 8
        %s598 = scalar_lea.vmem %s0, %s597
        %p599 = scmp.lt.s32.totalorder %s40, 1
        %s600 = scalar_select %p599, %s40, 1
        %s601 = smul.addr %s600, 4
        %s602 = smul.addr %s601, 4
        %s603 = scalar_lea.vmem %s2, %s602
        %p604 = scmp.lt.s32.totalorder %s40, 1
        %s605 = scalar_select %p604, %s40, 1
        %s606 = scalar_lea.vmem %s3, %s605
        %p607 = scmp.lt.s32.totalorder %s40, 1
        %s608 = scalar_select %p607, %s40, 1
        %s609 = smul.addr %s608, 4
        %s610 = smul.addr %s609, 4
        %s611 = scalar_lea.vmem %s4, %s610
        %p612 = scmp.lt.s32.totalorder %s40, 1
        %s613 = scalar_select %p612, %s40, 1
        %s614 = smul.addr %s613, 4
        %s615 = smul.addr %s614, 4
        %s616 = scalar_lea.vmem %s5, %s615
        %p617 = scmp.lt.s32.totalorder %s40, 1
        %s618 = scalar_select %p617, %s40, 1
        %s619 = smul.addr %s618, 8
        %s620 = smul.addr %s619, 4
        %s621 = scalar_lea.vmem %s8, %s620
        %p622 = scmp.lt.s32.totalorder %s40, 1
        %s623 = scalar_select %p622, %s40, 1
        %s624 = smul.addr %s623, 8
        %s625 = scalar_lea.vmem %s9, %s624
        %p627 = scmp.eq.s32.totalorder %s40, 0
        // Predicated region
        $region73: #{tpu_custom_call.1} parent=59 // pred_check
          %p628 = pneg %p627
        $region74: #{tpu_custom_call.1} parent=59 // pred_check_branch
          %630 = sbr.rel (%p628) target = $region76
        $region75: #{tpu_custom_call.1} parent=59 // pred_region
          %v631 = vld [vmem:[%s598] sm:$0xff]
          %vm632 = vcmask 261120
          %633 = vst.msk [vmem:[#allocation2] sm:$0xff] %vm632, %v631
        $region76: #{tpu_custom_call.1} parent=59 // pred_fallthru
          _
        %v634 = vld [vmem:[#allocation2] sm:$0xff]
        %v635 = vld [vmem:[%s625] sm:$0x7f]
        %v636 = vld [vmem:[%s494] sm:$0xff]
        %v637 = vadd.f32 %v634, %v636
        %v638 = vpack.c.bf16 %v637, %v637
        %v639 = vld [vmem:[%s603] sm:$0xf]
        %v640 = vld [vmem:[%s603 + $0x4] sm:$0xf]
        %v641 = vld [vmem:[%s603 + $0x8] sm:$0xf]
        %v642 = vld [vmem:[%s603 + $0xc] sm:$0xf]
        %v643 = vld [vmem:[%s606] sm:$0x1]
        %v645 = vlaneseq
        %v646 = vshrl.u32 %v645, 7
        %v647 = vsub.s32 0, %v646
        %v648 = vrot.slane %v643, %v647
        %v654 = vunpack.c.l.b16 %v639
        %v655 = vunpack.c.l.b16 %v640
        %v656 = vunpack.c.l.b16 %v641
        %v657 = vunpack.c.l.b16 %v642
        %v658 = vpack.c.b16 %v655, %v654
        %v659 = vpack.c.b16 %v657, %v656
        %vm662 = vcmask 261120
        %v664 = vsel %vm662, %v638, 0
        %666 = vmatprep.subr.bf16.mxu0 0
        %667 = vmatpush1.bf16.msra.mxu0 %v658
        %668 = vmatprep.subr.bf16.mxu0 0
        %669 = vmatpush1.bf16.msra.mxu0 %v659
        %670 = vmatprep.subr.bf16.mxu0 0
        %671 = vmatpush1.bf16.msra.mxu0 0
        %672 = vmatprep.subr.bf16.mxu0 0
        %673 = vmatpush1.bf16.msra.mxu0 0
        %674 = vmatprep.subr.bf16.mxu0 0
        %675 = vmatpush1.bf16.msra.mxu0 0
        %676 = vmatprep.subr.bf16.mxu0 0
        %677 = vmatpush1.bf16.msra.mxu0 0
        %678 = vmatprep.subr.bf16.mxu0 0
        %679 = vmatpush1.bf16.msra.mxu0 0
        %680 = vmatprep.subr.bf16.mxu0 0
        %681 = vmatpush1.bf16.msra.mxu0 0
        %682 = vmatprep.subr.bf16.mxu0 0
        %683 = vmatpush1.bf16.msra.mxu0 0
        %684 = vmatprep.subr.bf16.mxu0 0
        %685 = vmatpush1.bf16.msra.mxu0 0
        %686 = vmatprep.subr.bf16.mxu0 0
        %687 = vmatpush1.bf16.msra.mxu0 0
        %688 = vmatprep.subr.bf16.mxu0 0
        %689 = vmatpush1.bf16.msra.mxu0 0
        %690 = vmatprep.subr.bf16.mxu0 0
        %691 = vmatpush1.bf16.msra.mxu0 0
        %692 = vmatprep.subr.bf16.mxu0 0
        %693 = vmatpush1.bf16.msra.mxu0 0
        %694 = vmatprep.subr.bf16.mxu0 0
        %695 = vmatpush1.bf16.msra.mxu0 0
        %696 = vmatprep.subr.bf16.mxu0 0
        %697 = vmatpush1.bf16.msra.mxu0 0
        %698 = vmatprep.mubr.bf16.mxu0 0
        %699 = vmatmul.mubr.bf16.gmra.mrb[0].mxu0 %v664
        %v700 = vpop.f32.mrb[0].mxu0
        %v701 = vadd.f32 %v648, %v700
        %v702 = vpop.f32.mrb[0].mxu0
        %v703 = vpop.f32.mrb[0].mxu0
        %v704 = vpop.f32.mrb[0].mxu0
        %705 = vdwg.mxu0
        %v706 = vpack.c.bf16 %v634, %v634
        %v707 = vld [vmem:[%s611] sm:$0xf]
        %v708 = vld [vmem:[%s611 + $0x4] sm:$0xf]
        %v709 = vld [vmem:[%s611 + $0x8] sm:$0xf]
        %v710 = vld [vmem:[%s611 + $0xc] sm:$0xf]
        %v711 = vlaneseq
        %v712 = vshrl.u32 %v711, 7
        %v713 = vsub.s32 6, %v712
        %v714 = vrot.slane %v635, %v713
        %v719 = vunpack.c.l.b16 %v707
        %v720 = vunpack.c.l.b16 %v708
        %v721 = vunpack.c.l.b16 %v709
        %v722 = vunpack.c.l.b16 %v710
        %v723 = vpack.c.b16 %v720, %v719
        %v724 = vpack.c.b16 %v722, %v721
        %v728 = vsel %vm662, %v706, 0
        %730 = vmatprep.subr.bf16.mxu0 0
        %731 = vmatpush1.bf16.msra.mxu0 %v723
        %732 = vmatprep.subr.bf16.mxu0 0
        %733 = vmatpush1.bf16.msra.mxu0 %v724
        %734 = vmatprep.subr.bf16.mxu0 0
        %735 = vmatpush1.bf16.msra.mxu0 0
        %736 = vmatprep.subr.bf16.mxu0 0
        %737 = vmatpush1.bf16.msra.mxu0 0
        %738 = vmatprep.subr.bf16.mxu0 0
        %739 = vmatpush1.bf16.msra.mxu0 0
        %740 = vmatprep.subr.bf16.mxu0 0
        %741 = vmatpush1.bf16.msra.mxu0 0
        %742 = vmatprep.subr.bf16.mxu0 0
        %743 = vmatpush1.bf16.msra.mxu0 0
        %744 = vmatprep.subr.bf16.mxu0 0
        %745 = vmatpush1.bf16.msra.mxu0 0
        %746 = vmatprep.subr.bf16.mxu0 0
        %747 = vmatpush1.bf16.msra.mxu0 0
        %748 = vmatprep.subr.bf16.mxu0 0
        %749 = vmatpush1.bf16.msra.mxu0 0
        %750 = vmatprep.subr.bf16.mxu0 0
        %751 = vmatpush1.bf16.msra.mxu0 0
        %752 = vmatprep.subr.bf16.mxu0 0
        %753 = vmatpush1.bf16.msra.mxu0 0
        %754 = vmatprep.subr.bf16.mxu0 0
        %755 = vmatpush1.bf16.msra.mxu0 0
        %756 = vmatprep.subr.bf16.mxu0 0
        %757 = vmatpush1.bf16.msra.mxu0 0
        %758 = vmatprep.subr.bf16.mxu0 0
        %759 = vmatpush1.bf16.msra.mxu0 0
        %760 = vmatprep.subr.bf16.mxu0 0
        %761 = vmatpush1.bf16.msra.mxu0 0
        %762 = vmatprep.mubr.bf16.mxu0 0
        %763 = vmatmul.mubr.bf16.gmra.mrb[0].mxu0 %v728
        %v764 = vpop.f32.mrb[0].mxu0
        %v765 = vadd.f32 %v714, %v764
        %v766 = vpop.f32.mrb[0].mxu0
        %v767 = vpop.f32.mrb[0].mxu0
        %v768 = vpop.f32.mrb[0].mxu0
        %769 = vdwg.mxu0
        %v770 = vld [vmem:[%s616] sm:$0xf]
        %v771 = vld [vmem:[%s616 + $0x4] sm:$0xf]
        %v772 = vld [vmem:[%s616 + $0x8] sm:$0xf]
        %v773 = vld [vmem:[%s616 + $0xc] sm:$0xf]
        %v774 = vpack.c.bf16 %v701, %v701
        %v775 = vpack.c.bf16 %v765, %v765
        %777 = vrot.lane.b32.xlu0 %v774, 96
        %v778 = vpop.permute.xlu0 %777
        %vm779 = vcmask 64512
        %v781 = vsel %vm779, %v774, 0
        %v784 = vsel %vm779, %v778, 0
        %786 = vmatprep.subr.bf16.mxu0 0
        %787 = vmatpush1.bf16.xpose.msra.mxu0 %v784
        %788 = vmatprep.subr.bf16.mxu0 0
        %789 = vmatpush1.bf16.xpose.msra.mxu0 0
        %790 = vmatprep.subr.bf16.mxu0 0
        %791 = vmatpush1.bf16.xpose.msra.mxu0 0
        %792 = vmatprep.subr.bf16.mxu0 0
        %793 = vmatpush1.bf16.xpose.msra.mxu0 0
        %794 = vmatprep.subr.bf16.mxu0 0
        %795 = vmatpush1.bf16.xpose.msra.mxu0 0
        %796 = vmatprep.subr.bf16.mxu0 0
        %797 = vmatpush1.bf16.xpose.msra.mxu0 0
        %798 = vmatprep.subr.bf16.mxu0 0
        %799 = vmatpush1.bf16.xpose.msra.mxu0 0
        %800 = vmatprep.subr.bf16.mxu0 0
        %801 = vmatpush1.bf16.xpose.msra.mxu0 0
        %802 = vmatprep.subr.bf16.mxu0 0
        %803 = vmatpush1.bf16.xpose.msra.mxu0 0
        %804 = vmatprep.subr.bf16.mxu0 0
        %805 = vmatpush1.bf16.xpose.msra.mxu0 0
        %806 = vmatprep.subr.bf16.mxu0 0
        %807 = vmatpush1.bf16.xpose.msra.mxu0 0
        %808 = vmatprep.subr.bf16.mxu0 0
        %809 = vmatpush1.bf16.xpose.msra.mxu0 0
        %810 = vmatprep.subr.bf16.mxu0 0
        %811 = vmatpush1.bf16.xpose.msra.mxu0 0
        %812 = vmatprep.subr.bf16.mxu0 0
        %813 = vmatpush1.bf16.xpose.msra.mxu0 0
        %814 = vmatprep.subr.bf16.mxu0 0
        %815 = vmatpush1.bf16.xpose.msra.mxu0 0
        %816 = vmatprep.subr.bf16.mxu0 0
        %817 = vmatpush1.bf16.xpose.msra.mxu0 0
        %818 = vmatprep.mubr.bf16.mxu0 0
        %819 = vmatmul.mubr.bf16.gmra.mrb[0].mxu0 %v781
        %v820 = vpop.f32.mrb[0].mxu0
        %v821 = vadd.f32 0.0, %v820
        %v822 = vpop.f32.mrb[0].mxu0
        %v823 = vpop.f32.mrb[0].mxu0
        %v824 = vpop.f32.mrb[0].mxu0
        %825 = vdwg.mxu0
        %v826 = vsel %vm779, %v821, -inf
        %827 = vmax.xlane.f32.xlu0 %v826
        %v828 = vpop.xlane.xlu0 %827
        %v829 = vsub.f32 %v821, %v828
        %v830 = vmul.f32 %v829, 1.442695
        %v831 = vpow.pop %v830
        %v832 = vsel %vm779, %v831, 0.0
        %833 = vadd.xlane.f32.xlu0 %v832
        %v834 = vpop.xlane.xlu0 %833
        %v835 = vrcp.pop %v834
        %v836 = vmul.f32 %v831, %v835
        %v837 = vadd.f32 %v836, 0.0
        %v838 = vpack.c.bf16 %v836, %v836
        %v840 = vsel %vm779, %v838, 0
        %vm842 = vcmask 1043456
        %v844 = vsel %vm842, %v775, 0
        %846 = vmatprep.subr.bf16.mxu0 0
        %847 = vmatpush1.bf16.msra.mxu0 %v844
        %848 = vmatprep.subr.bf16.mxu0 0
        %849 = vmatpush1.bf16.msra.mxu0 0
        %850 = vmatprep.subr.bf16.mxu0 0
        %851 = vmatpush1.bf16.msra.mxu0 0
        %852 = vmatprep.subr.bf16.mxu0 0
        %853 = vmatpush1.bf16.msra.mxu0 0
        %854 = vmatprep.subr.bf16.mxu0 0
        %855 = vmatpush1.bf16.msra.mxu0 0
        %856 = vmatprep.subr.bf16.mxu0 0
        %857 = vmatpush1.bf16.msra.mxu0 0
        %858 = vmatprep.subr.bf16.mxu0 0
        %859 = vmatpush1.bf16.msra.mxu0 0
        %860 = vmatprep.subr.bf16.mxu0 0
        %861 = vmatpush1.bf16.msra.mxu0 0
        %862 = vmatprep.subr.bf16.mxu0 0
        %863 = vmatpush1.bf16.msra.mxu0 0
        %864 = vmatprep.subr.bf16.mxu0 0
        %865 = vmatpush1.bf16.msra.mxu0 0
        %866 = vmatprep.subr.bf16.mxu0 0
        %867 = vmatpush1.bf16.msra.mxu0 0
        %868 = vmatprep.subr.bf16.mxu0 0
        %869 = vmatpush1.bf16.msra.mxu0 0
        %870 = vmatprep.subr.bf16.mxu0 0
        %871 = vmatpush1.bf16.msra.mxu0 0
        %872 = vmatprep.subr.bf16.mxu0 0
        %873 = vmatpush1.bf16.msra.mxu0 0
        %874 = vmatprep.subr.bf16.mxu0 0
        %875 = vmatpush1.bf16.msra.mxu0 0
        %876 = vmatprep.subr.bf16.mxu0 0
        %877 = vmatpush1.bf16.msra.mxu0 0
        %878 = vmatprep.mubr.bf16.mxu0 0
        %879 = vmatmul.mubr.bf16.gmra.mrb[0].mxu0 %v840
        %v880 = vpop.f32.mrb[0].mxu0
        %v881 = vadd.f32 0.0, %v880
        %v882 = vpop.f32.mrb[0].mxu0
        %v883 = vpop.f32.mrb[0].mxu0
        %v884 = vpop.f32.mrb[0].mxu0
        %885 = vdwg.mxu0
        %v886 = vpack.c.bf16 %v881, %v881
        %887 = vrot.lane.b32.xlu0 %v774, 120
        %v888 = vpop.permute.xlu0 %887
        %889 = vrot.lane.b32.xlu0 %v774, 88
        %v890 = vpop.permute.xlu0 %889
        %v892 = vsel %vm779, %v888, 0
        %v895 = vsel %vm779, %v890, 0
        %897 = vmatprep.subr.bf16.mxu0 0
        %898 = vmatpush1.bf16.xpose.msra.mxu0 %v895
        %899 = vmatprep.subr.bf16.mxu0 0
        %900 = vmatpush1.bf16.xpose.msra.mxu0 0
        %901 = vmatprep.subr.bf16.mxu0 0
        %902 = vmatpush1.bf16.xpose.msra.mxu0 0
        %903 = vmatprep.subr.bf16.mxu0 0
        %904 = vmatpush1.bf16.xpose.msra.mxu0 0
        %905 = vmatprep.subr.bf16.mxu0 0
        %906 = vmatpush1.bf16.xpose.msra.mxu0 0
        %907 = vmatprep.subr.bf16.mxu0 0
        %908 = vmatpush1.bf16.xpose.msra.mxu0 0
        %909 = vmatprep.subr.bf16.mxu0 0
        %910 = vmatpush1.bf16.xpose.msra.mxu0 0
        %911 = vmatprep.subr.bf16.mxu0 0
        %912 = vmatpush1.bf16.xpose.msra.mxu0 0
        %913 = vmatprep.subr.bf16.mxu0 0
        %914 = vmatpush1.bf16.xpose.msra.mxu0 0
        %915 = vmatprep.subr.bf16.mxu0 0
        %916 = vmatpush1.bf16.xpose.msra.mxu0 0
        %917 = vmatprep.subr.bf16.mxu0 0
        %918 = vmatpush1.bf16.xpose.msra.mxu0 0
        %919 = vmatprep.subr.bf16.mxu0 0
        %920 = vmatpush1.bf16.xpose.msra.mxu0 0
        %921 = vmatprep.subr.bf16.mxu0 0
        %922 = vmatpush1.bf16.xpose.msra.mxu0 0
        %923 = vmatprep.subr.bf16.mxu0 0
        %924 = vmatpush1.bf16.xpose.msra.mxu0 0
        %925 = vmatprep.subr.bf16.mxu0 0
        %926 = vmatpush1.bf16.xpose.msra.mxu0 0
        %927 = vmatprep.subr.bf16.mxu0 0
        %928 = vmatpush1.bf16.xpose.msra.mxu0 0
        %929 = vmatprep.mubr.bf16.mxu0 0
        %930 = vmatmul.mubr.bf16.gmra.mrb[0].mxu0 %v892
        %v931 = vpop.f32.mrb[0].mxu0
        %v932 = vadd.f32 0.0, %v931
        %v933 = vpop.f32.mrb[0].mxu0
        %v934 = vpop.f32.mrb[0].mxu0
        %v935 = vpop.f32.mrb[0].mxu0
        %936 = vdwg.mxu0
        %v937 = vsel %vm779, %v932, -inf
        %938 = vmax.xlane.f32.xlu0 %v937
        %v939 = vpop.xlane.xlu0 %938
        %v940 = vsub.f32 %v932, %v939
        %v941 = vmul.f32 %v940, 1.442695
        %v942 = vpow.pop %v941
        %v943 = vsel %vm779, %v942, 0.0
        %944 = vadd.xlane.f32.xlu0 %v943
        %v945 = vpop.xlane.xlu0 %944
        %v946 = vrcp.pop %v945
        %v947 = vmul.f32 %v942, %v946
        %v948 = vadd.f32 %v837, %v947
        %v949 = vpack.c.bf16 %v947, %v947
        %951 = vrot.lane.b32.xlu0 %v775, 120
        %v952 = vpop.permute.xlu0 %951
        %v954 = vsel %vm779, %v949, 0
        %v957 = vsel %vm842, %v952, 0
        %959 = vmatprep.subr.bf16.mxu0 0
        %960 = vmatpush1.bf16.msra.mxu0 %v957
        %961 = vmatprep.subr.bf16.mxu0 0
        %962 = vmatpush1.bf16.msra.mxu0 0
        %963 = vmatprep.subr.bf16.mxu0 0
        %964 = vmatpush1.bf16.msra.mxu0 0
        %965 = vmatprep.subr.bf16.mxu0 0
        %966 = vmatpush1.bf16.msra.mxu0 0
        %967 = vmatprep.subr.bf16.mxu0 0
        %968 = vmatpush1.bf16.msra.mxu0 0
        %969 = vmatprep.subr.bf16.mxu0 0
        %970 = vmatpush1.bf16.msra.mxu0 0
        %971 = vmatprep.subr.bf16.mxu0 0
        %972 = vmatpush1.bf16.msra.mxu0 0
        %973 = vmatprep.subr.bf16.mxu0 0
        %974 = vmatpush1.bf16.msra.mxu0 0
        %975 = vmatprep.subr.bf16.mxu0 0
        %976 = vmatpush1.bf16.msra.mxu0 0
        %977 = vmatprep.subr.bf16.mxu0 0
        %978 = vmatpush1.bf16.msra.mxu0 0
        %979 = vmatprep.subr.bf16.mxu0 0
        %980 = vmatpush1.bf16.msra.mxu0 0
        %981 = vmatprep.subr.bf16.mxu0 0
        %982 = vmatpush1.bf16.msra.mxu0 0
        %983 = vmatprep.subr.bf16.mxu0 0
        %984 = vmatpush1.bf16.msra.mxu0 0
        %985 = vmatprep.subr.bf16.mxu0 0
        %986 = vmatpush1.bf16.msra.mxu0 0
        %987 = vmatprep.subr.bf16.mxu0 0
        %988 = vmatpush1.bf16.msra.mxu0 0
        %989 = vmatprep.subr.bf16.mxu0 0
        %990 = vmatpush1.bf16.msra.mxu0 0
        %991 = vmatprep.mubr.bf16.mxu0 0
        %992 = vmatmul.mubr.bf16.gmra.mrb[0].mxu0 %v954
        %v993 = vpop.f32.mrb[0].mxu0
        %v994 = vadd.f32 0.0, %v993
        %v995 = vpop.f32.mrb[0].mxu0
        %v996 = vpop.f32.mrb[0].mxu0
        %v997 = vpop.f32.mrb[0].mxu0
        %998 = vdwg.mxu0
        %v999 = vpack.c.bf16 %v994, %v994
        %v1001 = vsel %vm779, %v999, 0
        %v1004 = vsel %vm842, %v771, 0
        %1006 = vmatprep.subr.bf16.mxu0 0
        %1007 = vmatpush1.bf16.msra.mxu0 %v1004
        %1008 = vmatprep.subr.bf16.mxu0 0
        %1009 = vmatpush1.bf16.msra.mxu0 0
        %1010 = vmatprep.subr.bf16.mxu0 0
        %1011 = vmatpush1.bf16.msra.mxu0 0
        %1012 = vmatprep.subr.bf16.mxu0 0
        %1013 = vmatpush1.bf16.msra.mxu0 0
        %1014 = vmatprep.subr.bf16.mxu0 0
        %1015 = vmatpush1.bf16.msra.mxu0 0
        %1016 = vmatprep.subr.bf16.mxu0 0
        %1017 = vmatpush1.bf16.msra.mxu0 0
        %1018 = vmatprep.subr.bf16.mxu0 0
        %1019 = vmatpush1.bf16.msra.mxu0 0
        %1020 = vmatprep.subr.bf16.mxu0 0
        %1021 = vmatpush1.bf16.msra.mxu0 0
        %1022 = vmatprep.subr.bf16.mxu0 0
        %1023 = vmatpush1.bf16.msra.mxu0 0
        %1024 = vmatprep.subr.bf16.mxu0 0
        %1025 = vmatpush1.bf16.msra.mxu0 0
        %1026 = vmatprep.subr.bf16.mxu0 0
        %1027 = vmatpush1.bf16.msra.mxu0 0
        %1028 = vmatprep.subr.bf16.mxu0 0
        %1029 = vmatpush1.bf16.msra.mxu0 0
        %1030 = vmatprep.subr.bf16.mxu0 0
        %1031 = vmatpush1.bf16.msra.mxu0 0
        %1032 = vmatprep.subr.bf16.mxu0 0
        %1033 = vmatpush1.bf16.msra.mxu0 0
        %1034 = vmatprep.subr.bf16.mxu0 0
        %1035 = vmatpush1.bf16.msra.mxu0 0
        %1036 = vmatprep.subr.bf16.mxu0 0
        %1037 = vmatpush1.bf16.msra.mxu0 0
        %1038 = vmatprep.mubr.bf16.mxu0 0
        %1039 = vmatmul.mubr.bf16.gmra.mrb[0].mxu0 %v1001
        %v1040 = vpop.f32.mrb[0].mxu0
        %v1041 = vadd.f32 0.0, %v1040
        %v1042 = vpop.f32.mrb[0].mxu0
        %v1043 = vpop.f32.mrb[0].mxu0
        %v1044 = vpop.f32.mrb[0].mxu0
        %1045 = vdwg.mxu0
        %v1047 = vsel %vm779, %v886, 0
        %v1050 = vsel %vm842, %v770, 0
        %1052 = vmatprep.subr.bf16.mxu0 0
        %1053 = vmatpush1.bf16.msra.mxu0 %v1050
        %1054 = vmatprep.subr.bf16.mxu0 0
        %1055 = vmatpush1.bf16.msra.mxu0 0
        %1056 = vmatprep.subr.bf16.mxu0 0
        %1057 = vmatpush1.bf16.msra.mxu0 0
        %1058 = vmatprep.subr.bf16.mxu0 0
        %1059 = vmatpush1.bf16.msra.mxu0 0
        %1060 = vmatprep.subr.bf16.mxu0 0
        %1061 = vmatpush1.bf16.msra.mxu0 0
        %1062 = vmatprep.subr.bf16.mxu0 0
        %1063 = vmatpush1.bf16.msra.mxu0 0
        %1064 = vmatprep.subr.bf16.mxu0 0
        %1065 = vmatpush1.bf16.msra.mxu0 0
        %1066 = vmatprep.subr.bf16.mxu0 0
        %1067 = vmatpush1.bf16.msra.mxu0 0
        %1068 = vmatprep.subr.bf16.mxu0 0
        %1069 = vmatpush1.bf16.msra.mxu0 0
        %1070 = vmatprep.subr.bf16.mxu0 0
        %1071 = vmatpush1.bf16.msra.mxu0 0
        %1072 = vmatprep.subr.bf16.mxu0 0
        %1073 = vmatpush1.bf16.msra.mxu0 0
        %1074 = vmatprep.subr.bf16.mxu0 0
        %1075 = vmatpush1.bf16.msra.mxu0 0
        %1076 = vmatprep.subr.bf16.mxu0 0
        %1077 = vmatpush1.bf16.msra.mxu0 0
        %1078 = vmatprep.subr.bf16.mxu0 0
        %1079 = vmatpush1.bf16.msra.mxu0 0
        %1080 = vmatprep.subr.bf16.mxu0 0
        %1081 = vmatpush1.bf16.msra.mxu0 0
        %1082 = vmatprep.subr.bf16.mxu0 0
        %1083 = vmatpush1.bf16.msra.mxu0 0
        %1084 = vmatprep.mubr.bf16.mxu0 0
        %1085 = vmatmul.mubr.bf16.gmra.mrb[0].mxu0 %v1047
        %v1086 = vpop.f32.mrb[0].mxu0
        %v1087 = vadd.f32 %v1041, %v1086
        %v1088 = vpop.f32.mrb[0].mxu0
        %v1089 = vpop.f32.mrb[0].mxu0
        %v1090 = vpop.f32.mrb[0].mxu0
        %1091 = vdwg.mxu0
        %1092 = vrot.lane.b32.xlu0 %v774, 112
        %v1093 = vpop.permute.xlu0 %1092
        %1094 = vrot.lane.b32.xlu0 %v774, 80
        %v1095 = vpop.permute.xlu0 %1094
        %v1097 = vsel %vm779, %v1093, 0
        %v1100 = vsel %vm779, %v1095, 0
        %1102 = vmatprep.subr.bf16.mxu0 0
        %1103 = vmatpush1.bf16.xpose.msra.mxu0 %v1100
        %1104 = vmatprep.subr.bf16.mxu0 0
        %1105 = vmatpush1.bf16.xpose.msra.mxu0 0
        %1106 = vmatprep.subr.bf16.mxu0 0
        %1107 = vmatpush1.bf16.xpose.msra.mxu0 0
        %1108 = vmatprep.subr.bf16.mxu0 0
        %1109 = vmatpush1.bf16.xpose.msra.mxu0 0
        %1110 = vmatprep.subr.bf16.mxu0 0
        %1111 = vmatpush1.bf16.xpose.msra.mxu0 0
        %1112 = vmatprep.subr.bf16.mxu0 0
        %1113 = vmatpush1.bf16.xpose.msra.mxu0 0
        %1114 = vmatprep.subr.bf16.mxu0 0
        %1115 = vmatpush1.bf16.xpose.msra.mxu0 0
        %1116 = vmatprep.subr.bf16.mxu0 0
        %1117 = vmatpush1.bf16.xpose.msra.mxu0 0
        %1118 = vmatprep.subr.bf16.mxu0 0
        %1119 = vmatpush1.bf16.xpose.msra.mxu0 0
        %1120 = vmatprep.subr.bf16.mxu0 0
        %1121 = vmatpush1.bf16.xpose.msra.mxu0 0
        %1122 = vmatprep.subr.bf16.mxu0 0
        %1123 = vmatpush1.bf16.xpose.msra.mxu0 0
        %1124 = vmatprep.subr.bf16.mxu0 0
        %1125 = vmatpush1.bf16.xpose.msra.mxu0 0
        %1126 = vmatprep.subr.bf16.mxu0 0
        %1127 = vmatpush1.bf16.xpose.msra.mxu0 0
        %1128 = vmatprep.subr.bf16.mxu0 0
        %1129 = vmatpush1.bf16.xpose.msra.mxu0 0
        %1130 = vmatprep.subr.bf16.mxu0 0
        %1131 = vmatpush1.bf16.xpose.msra.mxu0 0
        %1132 = vmatprep.subr.bf16.mxu0 0
        %1133 = vmatpush1.bf16.xpose.msra.mxu0 0
        %1134 = vmatprep.mubr.bf16.mxu0 0
        %1135 = vmatmul.mubr.bf16.gmra.mrb[0].mxu0 %v1097
        %v1136 = vpop.f32.mrb[0].mxu0
        %v1137 = vadd.f32 0.0, %v1136
        %v1138 = vpop.f32.mrb[0].mxu0
        %v1139 = vpop.f32.mrb[0].mxu0
        %v1140 = vpop.f32.mrb[0].mxu0
        %1141 = vdwg.mxu0
        %v1142 = vsel %vm779, %v1137, -inf
        %1143 = vmax.xlane.f32.xlu0 %v1142
        %v1144 = vpop.xlane.xlu0 %1143
        %v1145 = vsub.f32 %v1137, %v1144
        %v1146 = vmul.f32 %v1145, 1.442695
        %v1147 = vpow.pop %v1146
        %v1148 = vsel %vm779, %v1147, 0.0
        %1149 = vadd.xlane.f32.xlu0 %v1148
        %v1150 = vpop.xlane.xlu0 %1149
        %v1151 = vrcp.pop %v1150
        %v1152 = vmul.f32 %v1147, %v1151
        %v1153 = vadd.f32 %v948, %v1152
        %v1154 = vpack.c.bf16 %v1152, %v1152
        %1155 = vrot.lane.b32.xlu0 %v775, 112
        %v1156 = vpop.permute.xlu0 %1155
        %v1158 = vsel %vm779, %v1154, 0
        %v1161 = vsel %vm842, %v1156, 0
        %1163 = vmatprep.subr.bf16.mxu0 0
        %1164 = vmatpush1.bf16.msra.mxu0 %v1161
        %1165 = vmatprep.subr.bf16.mxu0 0
        %1166 = vmatpush1.bf16.msra.mxu0 0
        %1167 = vmatprep.subr.bf16.mxu0 0
        %1168 = vmatpush1.bf16.msra.mxu0 0
        %1169 = vmatprep.subr.bf16.mxu0 0
        %1170 = vmatpush1.bf16.msra.mxu0 0
        %1171 = vmatprep.subr.bf16.mxu0 0
        %1172 = vmatpush1.bf16.msra.mxu0 0
        %1173 = vmatprep.subr.bf16.mxu0 0
        %1174 = vmatpush1.bf16.msra.mxu0 0
        %1175 = vmatprep.subr.bf16.mxu0 0
        %1176 = vmatpush1.bf16.msra.mxu0 0
        %1177 = vmatprep.subr.bf16.mxu0 0
        %1178 = vmatpush1.bf16.msra.mxu0 0
        %1179 = vmatprep.subr.bf16.mxu0 0
        %1180 = vmatpush1.bf16.msra.mxu0 0
        %1181 = vmatprep.subr.bf16.mxu0 0
        %1182 = vmatpush1.bf16.msra.mxu0 0
        %1183 = vmatprep.subr.bf16.mxu0 0
        %1184 = vmatpush1.bf16.msra.mxu0 0
        %1185 = vmatprep.subr.bf16.mxu0 0
        %1186 = vmatpush1.bf16.msra.mxu0 0
        %1187 = vmatprep.subr.bf16.mxu0 0
        %1188 = vmatpush1.bf16.msra.mxu0 0
        %1189 = vmatprep.subr.bf16.mxu0 0
        %1190 = vmatpush1.bf16.msra.mxu0 0
        %1191 = vmatprep.subr.bf16.mxu0 0
        %1192 = vmatpush1.bf16.msra.mxu0 0
        %1193 = vmatprep.subr.bf16.mxu0 0
        %1194 = vmatpush1.bf16.msra.mxu0 0
        %1195 = vmatprep.mubr.bf16.mxu0 0
        %1196 = vmatmul.mubr.bf16.gmra.mrb[0].mxu0 %v1158
        %v1197 = vpop.f32.mrb[0].mxu0
        %v1198 = vadd.f32 0.0, %v1197
        %v1199 = vpop.f32.mrb[0].mxu0
        %v1200 = vpop.f32.mrb[0].mxu0
        %v1201 = vpop.f32.mrb[0].mxu0
        %1202 = vdwg.mxu0
        %v1203 = vpack.c.bf16 %v1198, %v1198
        %v1205 = vsel %vm779, %v1203, 0
        %v1208 = vsel %vm842, %v772, 0
        %1210 = vmatprep.subr.bf16.mxu0 0
        %1211 = vmatpush1.bf16.msra.mxu0 %v1208
        %1212 = vmatprep.subr.bf16.mxu0 0
        %1213 = vmatpush1.bf16.msra.mxu0 0
        %1214 = vmatprep.subr.bf16.mxu0 0
        %1215 = vmatpush1.bf16.msra.mxu0 0
        %1216 = vmatprep.subr.bf16.mxu0 0
        %1217 = vmatpush1.bf16.msra.mxu0 0
        %1218 = vmatprep.subr.bf16.mxu0 0
        %1219 = vmatpush1.bf16.msra.mxu0 0
        %1220 = vmatprep.subr.bf16.mxu0 0
        %1221 = vmatpush1.bf16.msra.mxu0 0
        %1222 = vmatprep.subr.bf16.mxu0 0
        %1223 = vmatpush1.bf16.msra.mxu0 0
        %1224 = vmatprep.subr.bf16.mxu0 0
        %1225 = vmatpush1.bf16.msra.mxu0 0
        %1226 = vmatprep.subr.bf16.mxu0 0
        %1227 = vmatpush1.bf16.msra.mxu0 0
        %1228 = vmatprep.subr.bf16.mxu0 0
        %1229 = vmatpush1.bf16.msra.mxu0 0
        %1230 = vmatprep.subr.bf16.mxu0 0
        %1231 = vmatpush1.bf16.msra.mxu0 0
        %1232 = vmatprep.subr.bf16.mxu0 0
        %1233 = vmatpush1.bf16.msra.mxu0 0
        %1234 = vmatprep.subr.bf16.mxu0 0
        %1235 = vmatpush1.bf16.msra.mxu0 0
        %1236 = vmatprep.subr.bf16.mxu0 0
        %1237 = vmatpush1.bf16.msra.mxu0 0
        %1238 = vmatprep.subr.bf16.mxu0 0
        %1239 = vmatpush1.bf16.msra.mxu0 0
        %1240 = vmatprep.subr.bf16.mxu0 0
        %1241 = vmatpush1.bf16.msra.mxu0 0
        %1242 = vmatprep.mubr.bf16.mxu0 0
        %1243 = vmatmul.mubr.bf16.gmra.mrb[0].mxu0 %v1205
        %v1244 = vpop.f32.mrb[0].mxu0
        %v1245 = vadd.f32 0.0, %v1244
        %v1246 = vpop.f32.mrb[0].mxu0
        %v1247 = vpop.f32.mrb[0].mxu0
        %v1248 = vpop.f32.mrb[0].mxu0
        %1249 = vdwg.mxu0
        %v1250 = vadd.f32 %v1087, %v1245
        %1251 = vrot.lane.b32.xlu0 %v774, 104
        %v1252 = vpop.permute.xlu0 %1251
        %1253 = vrot.lane.b32.xlu0 %v774, 72
        %v1254 = vpop.permute.xlu0 %1253
        %v1256 = vsel %vm779, %v1252, 0
        %v1259 = vsel %vm779, %v1254, 0
        %1261 = vmatprep.subr.bf16.mxu0 0
        %1262 = vmatpush1.bf16.xpose.msra.mxu0 %v1259
        %1263 = vmatprep.subr.bf16.mxu0 0
        %1264 = vmatpush1.bf16.xpose.msra.mxu0 0
        %1265 = vmatprep.subr.bf16.mxu0 0
        %1266 = vmatpush1.bf16.xpose.msra.mxu0 0
        %1267 = vmatprep.subr.bf16.mxu0 0
        %1268 = vmatpush1.bf16.xpose.msra.mxu0 0
        %1269 = vmatprep.subr.bf16.mxu0 0
        %1270 = vmatpush1.bf16.xpose.msra.mxu0 0
        %1271 = vmatprep.subr.bf16.mxu0 0
        %1272 = vmatpush1.bf16.xpose.msra.mxu0 0
        %1273 = vmatprep.subr.bf16.mxu0 0
        %1274 = vmatpush1.bf16.xpose.msra.mxu0 0
        %1275 = vmatprep.subr.bf16.mxu0 0
        %1276 = vmatpush1.bf16.xpose.msra.mxu0 0
        %1277 = vmatprep.subr.bf16.mxu0 0
        %1278 = vmatpush1.bf16.xpose.msra.mxu0 0
        %1279 = vmatprep.subr.bf16.mxu0 0
        %1280 = vmatpush1.bf16.xpose.msra.mxu0 0
        %1281 = vmatprep.subr.bf16.mxu0 0
        %1282 = vmatpush1.bf16.xpose.msra.mxu0 0
        %1283 = vmatprep.subr.bf16.mxu0 0
        %1284 = vmatpush1.bf16.xpose.msra.mxu0 0
        %1285 = vmatprep.subr.bf16.mxu0 0
        %1286 = vmatpush1.bf16.xpose.msra.mxu0 0
        %1287 = vmatprep.subr.bf16.mxu0 0
        %1288 = vmatpush1.bf16.xpose.msra.mxu0 0
        %1289 = vmatprep.subr.bf16.mxu0 0
        %1290 = vmatpush1.bf16.xpose.msra.mxu0 0
        %1291 = vmatprep.subr.bf16.mxu0 0
        %1292 = vmatpush1.bf16.xpose.msra.mxu0 0
        %1293 = vmatprep.mubr.bf16.mxu0 0
        %1294 = vmatmul.mubr.bf16.gmra.mrb[0].mxu0 %v1256
        %v1295 = vpop.f32.mrb[0].mxu0
        %v1296 = vadd.f32 0.0, %v1295
        %v1297 = vpop.f32.mrb[0].mxu0
        %v1298 = vpop.f32.mrb[0].mxu0
        %v1299 = vpop.f32.mrb[0].mxu0
        %1300 = vdwg.mxu0
        %v1301 = vsel %vm779, %v1296, -inf
        %1302 = vmax.xlane.f32.xlu0 %v1301
        %v1303 = vpop.xlane.xlu0 %1302
        %v1304 = vsub.f32 %v1296, %v1303
        %v1305 = vmul.f32 %v1304, 1.442695
        %v1306 = vpow.pop %v1305
        %v1307 = vsel %vm779, %v1306, 0.0
        %1308 = vadd.xlane.f32.xlu0 %v1307
        %v1309 = vpop.xlane.xlu0 %1308
        %v1310 = vrcp.pop %v1309
        %v1311 = vmul.f32 %v1306, %v1310
        %v1312 = vadd.f32 %v1153, %v1311
        %v1313 = vpack.c.bf16 %v1311, %v1311
        %1314 = vrot.lane.b32.xlu0 %v775, 104
        %v1315 = vpop.permute.xlu0 %1314
        %v1317 = vsel %vm779, %v1313, 0
        %v1320 = vsel %vm842, %v1315, 0
        %1322 = vmatprep.subr.bf16.mxu0 0
        %1323 = vmatpush1.bf16.msra.mxu0 %v1320
        %1324 = vmatprep.subr.bf16.mxu0 0
        %1325 = vmatpush1.bf16.msra.mxu0 0
        %1326 = vmatprep.subr.bf16.mxu0 0
        %1327 = vmatpush1.bf16.msra.mxu0 0
        %1328 = vmatprep.subr.bf16.mxu0 0
        %1329 = vmatpush1.bf16.msra.mxu0 0
        %1330 = vmatprep.subr.bf16.mxu0 0
        %1331 = vmatpush1.bf16.msra.mxu0 0
        %1332 = vmatprep.subr.bf16.mxu0 0
        %1333 = vmatpush1.bf16.msra.mxu0 0
        %1334 = vmatprep.subr.bf16.mxu0 0
        %1335 = vmatpush1.bf16.msra.mxu0 0
        %1336 = vmatprep.subr.bf16.mxu0 0
        %1337 = vmatpush1.bf16.msra.mxu0 0
        %1338 = vmatprep.subr.bf16.mxu0 0
        %1339 = vmatpush1.bf16.msra.mxu0 0
        %1340 = vmatprep.subr.bf16.mxu0 0
        %1341 = vmatpush1.bf16.msra.mxu0 0
        %1342 = vmatprep.subr.bf16.mxu0 0
        %1343 = vmatpush1.bf16.msra.mxu0 0
        %1344 = vmatprep.subr.bf16.mxu0 0
        %1345 = vmatpush1.bf16.msra.mxu0 0
        %1346 = vmatprep.subr.bf16.mxu0 0
        %1347 = vmatpush1.bf16.msra.mxu0 0
        %1348 = vmatprep.subr.bf16.mxu0 0
        %1349 = vmatpush1.bf16.msra.mxu0 0
        %1350 = vmatprep.subr.bf16.mxu0 0
        %1351 = vmatpush1.bf16.msra.mxu0 0
        %1352 = vmatprep.subr.bf16.mxu0 0
        %1353 = vmatpush1.bf16.msra.mxu0 0
        %1354 = vmatprep.mubr.bf16.mxu0 0
        %1355 = vmatmul.mubr.bf16.gmra.mrb[0].mxu0 %v1317
        %v1356 = vpop.f32.mrb[0].mxu0
        %v1357 = vadd.f32 0.0, %v1356
        %v1358 = vpop.f32.mrb[0].mxu0
        %v1359 = vpop.f32.mrb[0].mxu0
        %v1360 = vpop.f32.mrb[0].mxu0
        %1361 = vdwg.mxu0
        %v1362 = vpack.c.bf16 %v1357, %v1357
        %v1364 = vsel %vm779, %v1362, 0
        %v1367 = vsel %vm842, %v773, 0
        %1369 = vmatprep.subr.bf16.mxu0 0
        %1370 = vmatpush1.bf16.msra.mxu0 %v1367
        %1371 = vmatprep.subr.bf16.mxu0 0
        %1372 = vmatpush1.bf16.msra.mxu0 0
        %1373 = vmatprep.subr.bf16.mxu0 0
        %1374 = vmatpush1.bf16.msra.mxu0 0
        %1375 = vmatprep.subr.bf16.mxu0 0
        %1376 = vmatpush1.bf16.msra.mxu0 0
        %1377 = vmatprep.subr.bf16.mxu0 0
        %1378 = vmatpush1.bf16.msra.mxu0 0
        %1379 = vmatprep.subr.bf16.mxu0 0
        %1380 = vmatpush1.bf16.msra.mxu0 0
        %1381 = vmatprep.subr.bf16.mxu0 0
        %1382 = vmatpush1.bf16.msra.mxu0 0
        %1383 = vmatprep.subr.bf16.mxu0 0
        %1384 = vmatpush1.bf16.msra.mxu0 0
        %1385 = vmatprep.subr.bf16.mxu0 0
        %1386 = vmatpush1.bf16.msra.mxu0 0
        %1387 = vmatprep.subr.bf16.mxu0 0
        %1388 = vmatpush1.bf16.msra.mxu0 0
        %1389 = vmatprep.subr.bf16.mxu0 0
        %1390 = vmatpush1.bf16.msra.mxu0 0
        %1391 = vmatprep.subr.bf16.mxu0 0
        %1392 = vmatpush1.bf16.msra.mxu0 0
        %1393 = vmatprep.subr.bf16.mxu0 0
        %1394 = vmatpush1.bf16.msra.mxu0 0
        %1395 = vmatprep.subr.bf16.mxu0 0
        %1396 = vmatpush1.bf16.msra.mxu0 0
        %1397 = vmatprep.subr.bf16.mxu0 0
        %1398 = vmatpush1.bf16.msra.mxu0 0
        %1399 = vmatprep.subr.bf16.mxu0 0
        %1400 = vmatpush1.bf16.msra.mxu0 0
        %1401 = vmatprep.mubr.bf16.mxu0 0
        %1402 = vmatmul.mubr.bf16.gmra.mrb[0].mxu0 %v1364
        %v1403 = vpop.f32.mrb[0].mxu0
        %v1404 = vadd.f32 0.0, %v1403
        %v1405 = vpop.f32.mrb[0].mxu0
        %v1406 = vpop.f32.mrb[0].mxu0
        %v1407 = vpop.f32.mrb[0].mxu0
        %1408 = vdwg.mxu0
        %v1409 = vadd.f32 %v1250, %v1404
        %v1410 = vlaneseq
        %v1411 = vshrl.u32 %v1410, 7
        %v1412 = vsub.s32 4, %v1411
        %v1413 = vrot.slane %v635, %v1412
        %v1414 = vadd.f32 %v1409, %v1413
        %v1415 = vmul.f32 %v1312, 0.25
        %1416 = vst.msk [vmem:[%s594] sm:$0xff] %vm779, %v1415
        %v1417 = vadd.f32 %v634, %v1414
        %v1418 = vsel %vm662, %v1417, 0.0
        %1419 = vadd.xlane.f32.xlu0 %v1418
        %v1420 = vpop.xlane.xlu0 %1419
        %v1421 = vrcp.pop 32.0
        %v1422 = vmul.f32 %v1420, %v1421
        %v1423 = vsub.f32 %v1417, %v1422
        %v1424 = vmul.f32 %v1423, %v1423
        %v1425 = vsel %vm662, %v1424, 0.0
        %1426 = vadd.xlane.f32.xlu0 %v1425
        %v1427 = vpop.xlane.xlu0 %1426
        %v1428 = vmul.f32 %v1427, %v1421
        %v1429 = vadd.f32 %v1428, 1e-05
        %v1430 = vrsqrt.pop %v1429
        %v1431 = vmul.f32 %v1423, %v1430
        %v1432 = vlaneseq
        %v1433 = vshrl.u32 %v1432, 7
        %v1434 = vsub.s32 0, %v1433
        %v1435 = vrot.slane %v635, %v1434
        %v1436 = vmul.f32 %v1431, %v1435
        %v1437 = vlaneseq
        %v1438 = vshrl.u32 %v1437, 7
        %v1439 = vsub.s32 1, %v1438
        %v1440 = vrot.slane %v635, %v1439
        %v1441 = vadd.f32 %v1436, %v1440
        %v1442 = vpack.c.bf16 %v1441, %v1441
        %v1443 = vld [vmem:[%s503] sm:$0xf]
        %v1444 = vld [vmem:[%s503 + $0x4] sm:$0xf]
        %v1445 = vld [vmem:[%s503 + $0x8] sm:$0xf]
        %v1446 = vld [vmem:[%s503 + $0xc] sm:$0xf]
        %v1447 = vld [vmem:[%s511] sm:$0x1]
        %v1449 = vlaneseq
        %v1450 = vshrl.u32 %v1449, 7
        %v1451 = vsub.s32 0, %v1450
        %v1452 = vrot.slane %v1447, %v1451
        %v1458 = vunpack.c.l.b16 %v1443
        %v1459 = vunpack.c.l.b16 %v1444
        %v1460 = vunpack.c.l.b16 %v1445
        %v1461 = vunpack.c.l.b16 %v1446
        %v1462 = vpack.c.b16 %v1459, %v1458
        %v1463 = vpack.c.b16 %v1461, %v1460
        %v1467 = vsel %vm662, %v1442, 0
        %1469 = vmatprep.subr.bf16.mxu0 0
        %1470 = vmatpush1.bf16.msra.mxu0 %v1462
        %1471 = vmatprep.subr.bf16.mxu0 0
        %1472 = vmatpush1.bf16.msra.mxu0 %v1463
        %1473 = vmatprep.subr.bf16.mxu0 0
        %1474 = vmatpush1.bf16.msra.mxu0 0
        %1475 = vmatprep.subr.bf16.mxu0 0
        %1476 = vmatpush1.bf16.msra.mxu0 0
        %1477 = vmatprep.subr.bf16.mxu0 0
        %1478 = vmatpush1.bf16.msra.mxu0 0
        %1479 = vmatprep.subr.bf16.mxu0 0
        %1480 = vmatpush1.bf16.msra.mxu0 0
        %1481 = vmatprep.subr.bf16.mxu0 0
        %1482 = vmatpush1.bf16.msra.mxu0 0
        %1483 = vmatprep.subr.bf16.mxu0 0
        %1484 = vmatpush1.bf16.msra.mxu0 0
        %1485 = vmatprep.subr.bf16.mxu0 0
        %1486 = vmatpush1.bf16.msra.mxu0 0
        %1487 = vmatprep.subr.bf16.mxu0 0
        %1488 = vmatpush1.bf16.msra.mxu0 0
        %1489 = vmatprep.subr.bf16.mxu0 0
        %1490 = vmatpush1.bf16.msra.mxu0 0
        %1491 = vmatprep.subr.bf16.mxu0 0
        %1492 = vmatpush1.bf16.msra.mxu0 0
        %1493 = vmatprep.subr.bf16.mxu0 0
        %1494 = vmatpush1.bf16.msra.mxu0 0
        %1495 = vmatprep.subr.bf16.mxu0 0
        %1496 = vmatpush1.bf16.msra.mxu0 0
        %1497 = vmatprep.subr.bf16.mxu0 0
        %1498 = vmatpush1.bf16.msra.mxu0 0
        %1499 = vmatprep.subr.bf16.mxu0 0
        %1500 = vmatpush1.bf16.msra.mxu0 0
        %1501 = vmatprep.mubr.bf16.mxu0 0
        %1502 = vmatmul.mubr.bf16.gmra.mrb[0].mxu0 %v1467
        %v1503 = vpop.f32.mrb[0].mxu0
        %v1504 = vadd.f32 %v1452, %v1503
        %v1505 = vpop.f32.mrb[0].mxu0
        %v1506 = vpop.f32.mrb[0].mxu0
        %v1507 = vpop.f32.mrb[0].mxu0
        %1508 = vdwg.mxu0
        %v1509 = vmax.f32 %v1504, 0.0
        %v1510 = vpack.c.bf16 %v1509, %v1509
        %v1511 = vld [vmem:[%s621] sm:$0xf]
        %v1512 = vld [vmem:[%s621 + $0x4] sm:$0xf]
        %v1513 = vld [vmem:[%s621 + $0x8] sm:$0xf]
        %v1514 = vld [vmem:[%s621 + $0xc] sm:$0xf]
        %v1515 = vld [vmem:[%s621 + $0x10] sm:$0xf]
        %v1516 = vld [vmem:[%s621 + $0x14] sm:$0xf]
        %v1517 = vld [vmem:[%s621 + $0x18] sm:$0xf]
        %v1518 = vld [vmem:[%s621 + $0x1c] sm:$0xf]
        %v1519 = vlaneseq
        %v1520 = vshrl.u32 %v1519, 7
        %v1521 = vsub.s32 5, %v1520
        %v1522 = vrot.slane %v635, %v1521
        %v1531 = vunpack.c.l.b16 %v1511
        %v1532 = vunpack.c.l.b16 %v1512
        %v1533 = vunpack.c.l.b16 %v1513
        %v1534 = vunpack.c.l.b16 %v1514
        %v1535 = vunpack.c.l.b16 %v1515
        %v1536 = vunpack.c.l.b16 %v1516
        %v1537 = vunpack.c.l.b16 %v1517
        %v1538 = vunpack.c.l.b16 %v1518
        %v1539 = vpack.c.b16 %v1532, %v1531
        %v1540 = vpack.c.b16 %v1534, %v1533
        %v1541 = vpack.c.b16 %v1536, %v1535
        %v1542 = vpack.c.b16 %v1538, %v1537
        %vm1547 = vcmask 523264
        %v1549 = vsel %vm1547, %v1510, 0
        %1551 = vmatprep.subr.bf16.mxu0 0
        %1552 = vmatpush1.bf16.msra.mxu0 %v1539
        %1553 = vmatprep.subr.bf16.mxu0 0
        %1554 = vmatpush1.bf16.msra.mxu0 %v1540
        %1555 = vmatprep.subr.bf16.mxu0 0
        %1556 = vmatpush1.bf16.msra.mxu0 %v1541
        %1557 = vmatprep.subr.bf16.mxu0 0
        %1558 = vmatpush1.bf16.msra.mxu0 %v1542
        %1559 = vmatprep.subr.bf16.mxu0 0
        %1560 = vmatpush1.bf16.msra.mxu0 0
        %1561 = vmatprep.subr.bf16.mxu0 0
        %1562 = vmatpush1.bf16.msra.mxu0 0
        %1563 = vmatprep.subr.bf16.mxu0 0
        %1564 = vmatpush1.bf16.msra.mxu0 0
        %1565 = vmatprep.subr.bf16.mxu0 0
        %1566 = vmatpush1.bf16.msra.mxu0 0
        %1567 = vmatprep.subr.bf16.mxu0 0
        %1568 = vmatpush1.bf16.msra.mxu0 0
        %1569 = vmatprep.subr.bf16.mxu0 0
        %1570 = vmatpush1.bf16.msra.mxu0 0
        %1571 = vmatprep.subr.bf16.mxu0 0
        %1572 = vmatpush1.bf16.msra.mxu0 0
        %1573 = vmatprep.subr.bf16.mxu0 0
        %1574 = vmatpush1.bf16.msra.mxu0 0
        %1575 = vmatprep.subr.bf16.mxu0 0
        %1576 = vmatpush1.bf16.msra.mxu0 0
        %1577 = vmatprep.subr.bf16.mxu0 0
        %1578 = vmatpush1.bf16.msra.mxu0 0
        %1579 = vmatprep.subr.bf16.mxu0 0
        %1580 = vmatpush1.bf16.msra.mxu0 0
        %1581 = vmatprep.subr.bf16.mxu0 0
        %1582 = vmatpush1.bf16.msra.mxu0 0
        %1583 = vmatprep.mubr.bf16.mxu0 0
        %1584 = vmatmul.mubr.bf16.gmra.mrb[0].mxu0 %v1549
        %v1585 = vpop.f32.mrb[0].mxu0
        %v1586 = vadd.f32 %v1522, %v1585
        %v1587 = vpop.f32.mrb[0].mxu0
        %v1588 = vpop.f32.mrb[0].mxu0
        %v1589 = vpop.f32.mrb[0].mxu0
        %1590 = vdwg.mxu0
        %v1591 = vadd.f32 %v1441, %v1586
        %v1592 = vsel %vm662, %v1591, 0.0
        %1593 = vadd.xlane.f32.xlu0 %v1592
        %v1594 = vpop.xlane.xlu0 %1593
        %v1595 = vmul.f32 %v1594, %v1421
        %v1596 = vsub.f32 %v1591, %v1595
        %v1597 = vmul.f32 %v1596, %v1596
        %v1598 = vsel %vm662, %v1597, 0.0
        %1599 = vadd.xlane.f32.xlu0 %v1598
        %v1600 = vpop.xlane.xlu0 %1599
        %v1601 = vmul.f32 %v1600, %v1421
        %v1602 = vadd.f32 %v1601, 1e-05
        %v1603 = vrsqrt.pop %v1602
        %v1604 = vmul.f32 %v1596, %v1603
        %v1605 = vlaneseq
        %v1606 = vshrl.u32 %v1605, 7
        %v1607 = vsub.s32 2, %v1606
        %v1608 = vrot.slane %v635, %v1607
        %v1609 = vmul.f32 %v1604, %v1608
        %v1610 = vlaneseq
        %v1611 = vshrl.u32 %v1610, 7
        %v1612 = vsub.s32 3, %v1611
        %v1613 = vrot.slane %v635, %v1612
        %v1614 = vadd.f32 %v1609, %v1613
        %1615 = vst.msk [vmem:[#allocation2] sm:$0xff] %vm662, %v1614
        %p1616 = scmp.eq.s32.totalorder %s40, 1
        // Predicated region
        $region77: #{tpu_custom_call.1} parent=59 // pred_check
          %p1617 = pneg %p1616
        $region78: #{tpu_custom_call.1} parent=59 // pred_check_branch
          %1619 = sbr.rel (%p1617) target = $region80
        $region79: #{tpu_custom_call.1} parent=59 // pred_region
          %1620 = vst.msk [vmem:[%s587] sm:$0xff] %vm662, %v1614
        $region80: #{tpu_custom_call.1} parent=59 // pred_fallthru
          _
        %s1621 = sand.u32 %s315, 1
        %s1622 = scalar_lea.sflag [#allocation5], %s1621
        %s1623 = sand.u32 %s315, 1
        %s1624 = smul.addr %s1623, 8
        %s1625 = scalar_lea.vmem [#allocation9], %s1624
        %s1626 = sand.u32 %s343, 1
        %s1627 = scalar_lea.sflag [#allocation11], %s1626
        %s1628 = sand.u32 %s343, 1
        %s1629 = smul.addr %s1628, 8
        %s1630 = scalar_lea.vmem [#allocation10], %s1629
        // Predicated region
        $region81: #{tpu_custom_call.1} parent=59 // pred_check
          %p1631 = pneg %p325
        $region82: #{tpu_custom_call.1} parent=59 // pred_check_branch
          %1633 = sbr.rel (%p1631) target = $region84
        $region83: #{tpu_custom_call.1} parent=59 // pred_region
          %s1635 = ssub.s32 128, 128
          %1636 = vsyncadd %s1622, %s1635
          %s1637 = smul.addr %s39, 128
          %s1638 = scalar_lea.hbm %s10, %s1637
          %s1640 = sshll.u32 %s1625, 4
          %s1641 = int_to_ptr.vmem [resolvable:$true] %s1640
          %1643 = dma.vmem_to_hbm [thread:$0]  %s1641, 128, %s1638, %s1622
        $region84: #{tpu_custom_call.1} parent=59 // pred_fallthru
          _
        // Predicated region
        $region85: #{tpu_custom_call.1} parent=59 // pred_check
          %p1644 = pneg %p353
        $region86: #{tpu_custom_call.1} parent=59 // pred_check_branch
          %1646 = sbr.rel (%p1644) target = $region88
        $region87: #{tpu_custom_call.1} parent=59 // pred_region
          %s1648 = ssub.s32 128, 128
          %1649 = vsyncadd %s1627, %s1648
          %s1650 = smul.addr %s40, 2
          %s1651 = sadd.s32 %s39, %s1650
          %s1652 = smul.addr %s1651, 128
          %s1653 = scalar_lea.hbm %s11, %s1652
          %s1655 = sshll.u32 %s1630, 4
          %s1656 = int_to_ptr.vmem [resolvable:$true] %s1655
          %1658 = dma.vmem_to_hbm [thread:$0]  %s1656, 128, %s1653, %s1627
        $region88: #{tpu_custom_call.1} parent=59 // pred_fallthru
          _
      $region60: #{tpu_custom_call.1} parent=5 // pred_fallthru
        _
      %p1659 = scmp.le.s32.totalorder 2, %s30
      // Predicated region
      $region89: #{tpu_custom_call.1} parent=5 // pred_check
        %p1660 = pneg %p1659
      $region90: #{tpu_custom_call.1} parent=5 // pred_check_branch
        %1662 = sbr.rel (%p1660) target = $region92
      $region91: #{tpu_custom_call.1} parent=5 // pred_region
        %s1663 = ssub.s32 %s30, 2
        // Predicated region
        $region93: #{tpu_custom_call.1} parent=91 // pred_check
          %p1664 = pneg %p331
        $region94: #{tpu_custom_call.1} parent=91 // pred_check_branch
          %1666 = sbr.rel (%p1664) target = $region96
        $region95: #{tpu_custom_call.1} parent=91 // pred_region
          %s1667 = sand.u32 %s316, 1
          %s1668 = scalar_lea.sflag [#allocation5], %s1667
          %s1669 = sand.u32 %s316, 1
          %s1670 = smul.addr %s1669, 8
          %s1671 = scalar_lea.vmem [#allocation9], %s1670
          %1672 = dma.done %s1668, 128
        $region96: #{tpu_custom_call.1} parent=91 // pred_fallthru
          _
        // Predicated region
        $region97: #{tpu_custom_call.1} parent=91 // pred_check
          %p1673 = pneg %p359
        $region98: #{tpu_custom_call.1} parent=91 // pred_check_branch
          %1675 = sbr.rel (%p1673) target = $region100
        $region99: #{tpu_custom_call.1} parent=91 // pred_region
          %s1676 = sand.u32 %s344, 1
          %s1677 = scalar_lea.sflag [#allocation11], %s1676
          %s1678 = sand.u32 %s344, 1
          %s1679 = smul.addr %s1678, 8
          %s1680 = scalar_lea.vmem [#allocation10], %s1679
          %1681 = dma.done %s1677, 128
        $region100: #{tpu_custom_call.1} parent=91 // pred_fallthru
          _
      $region92: #{tpu_custom_call.1} parent=5 // pred_fallthru
        _
    $region6: #{tpu_custom_call.1} parent=1 // loop_footer
      %s34 = sadd.s32 1, %s30
    $region7: #{tpu_custom_call.1} parent=1 // loop_footer_branch
      %29 = sbr.rel target = $region3
    $region8: #{tpu_custom_call.1} parent=1 // loop_exit
      _
    %1682 = vsyncpa [#allocation4], 1
    %s1683 = scalar_lea.sflag [#allocation4], 1
    %1684 = vsyncpa %s1683, 1
    %1685 = vsyncpa [#allocation7], 1
    %s1686 = scalar_lea.sflag [#allocation7], 1
    %1687 = vsyncpa %s1686, 1
    %1688 = vsyncpa [#allocation5], 1
    %s1689 = scalar_lea.sflag [#allocation5], 1
    %1690 = vsyncpa %s1689, 1
    %1691 = vsyncpa [#allocation11], 1
    %s1692 = scalar_lea.sflag [#allocation11], 1
    %1693 = vsyncpa %s1692, 1

</llo_original>
